<compile_context>
chip_gen: v6e
topology: v6e:2x2x1
jax: 0.10.0
libtpu: 0.0.40
codegen_flags: <defaults>
</compile_context>

<pallas_src>
import functools

import jax
import jax.numpy as jnp
from jax.experimental import pallas as pl
from jax.experimental.pallas import tpu as pltpu


# ---------------------------------------------------------------------------
# Portable counter-based PRNG for the dropout mask (p_keep = 0.5).
# Works identically on TPU (Mosaic) and in interpret mode; not bit-compatible
# with torch's RNG, but statistically equivalent.
# ---------------------------------------------------------------------------
def _keep_mask(shape, seed, col_offset):
    row = jax.lax.broadcasted_iota(jnp.int32, shape, 0)
    col = jax.lax.broadcasted_iota(jnp.int32, shape, 1) + col_offset
    # Weyl-sequence style counters + murmur-like mixing (int32 wraps mod 2^32).
    z = seed + row * jnp.int32(-1640531527) + col * jnp.int32(-2048144789)
    z = jax.lax.shift_right_logical(z, 15) ^ z
    z = z * jnp.int32(0x2C1B3C6D)
    z = jax.lax.shift_right_logical(z, 12) ^ z
    z = z * jnp.int32(0x297A2D39)
    z = jax.lax.shift_right_logical(z, 15) ^ z
    return jax.lax.shift_right_logical(z, 31) == 0          # top bit -> p(keep) = 0.5


# ---------------------------------------------------------------------------
# Kernel: one hidden-dimension tile per grid step, accumulate classifier output.
# ---------------------------------------------------------------------------
def fcblock_kernel(seed_ref, x_ref, w1_ref, gamma_ref, beta_ref, w2_ref, b2_ref,
                   out_ref, acc_ref):
    j = pl.program_id(0)
    block_h = w1_ref.shape[1]

    @pl.when(j == 0)
    def _init():
        acc_ref[...] = jnp.zeros_like(acc_ref)

    # ---- Linear(D -> block_h) on the MXU (bf16 operands, fp32 accumulate) --------
    # b1 omitted: training-mode BN subtracts the batch mean right after, so the bias
    # is algebraically a no-op.
    h = jnp.dot(x_ref[...], w1_ref[...], preferred_element_type=jnp.float32)  # (B, th) f32

    # ---- BatchNorm1d (training mode, biased variance), per-feature over full batch.
    # Single-pass: var = E[h^2] - mean^2 (clamped for numerical safety).
    inv_b = 1.0 / h.shape[0]
    mean = jnp.sum(h, axis=0, keepdims=True) * inv_b
    var = jnp.maximum(jnp.sum(h * h, axis=0, keepdims=True) * inv_b - mean * mean, 0.0)
    h = (h - mean) * jax.lax.rsqrt(var + 1e-5)
    h = h * gamma_ref[...] + beta_ref[...]

    # ---- LeakyReLU(0.1) + Dropout(p=0.5, inverted scaling), fused select chain ----
    keep = _keep_mask(h.shape, seed_ref[0], j * block_h)
    h = jnp.where(keep, jnp.where(h > 0, h, 0.1 * h) * 2.0, 0.0)

    # ---- Classifier partial product: accumulate this H tile's contribution --------
    acc_ref[...] += jnp.dot(h.astype(jnp.bfloat16), w2_ref[...],
                            preferred_element_type=jnp.float32)

    @pl.when(j == pl.num_programs(0) - 1)
    def _finalize():
        out_ref[...] = (acc_ref[...] + b2_ref[...]).astype(out_ref.dtype)


# ---------------------------------------------------------------------------
# Wrapper
# ---------------------------------------------------------------------------
@functools.partial(jax.jit, static_argnames=("block_h",))
def fcblock_forward(seed, x, w1, gamma, beta, w2, b2, *, block_h=128):
    B, D = x.shape
    H = w1.shape[1]
    C = w2.shape[1]
    assert H % block_h == 0, "num_bottleneck must be divisible by block_h"

    # Lane-dense classifier output: zero-pad N up to a multiple of 128.
    c_pad = max(128, ((C + 127) // 128) * 128)
    w2_p = jnp.zeros((H, c_pad), jnp.float32).at[:, :C].set(w2)
    b2_p = jnp.zeros((1, c_pad), jnp.float32).at[:, :C].set(b2)

    # bf16 matmul operands (fp32 accumulation inside the kernel); halves weight DMA.
    x_bf = x.astype(jnp.bfloat16)
    w1_bf = w1.astype(jnp.bfloat16)
    w2_bf = w2_p.astype(jnp.bfloat16)

    out = pl.pallas_call(
        fcblock_kernel,
        out_shape=jax.ShapeDtypeStruct((B, c_pad), jnp.float32),
        grid_spec=pltpu.PrefetchScalarGridSpec(
            num_scalar_prefetch=1,                 # dropout seed lands in SMEM
            grid=(H // block_h,),
            in_specs=[
                pl.BlockSpec((B, D), lambda j, s: (0, 0)),            # x (resident)
                pl.BlockSpec((D, block_h), lambda j, s: (0, j)),      # w1 tile
                pl.BlockSpec((1, block_h), lambda j, s: (0, j)),      # gamma tile
                pl.BlockSpec((1, block_h), lambda j, s: (0, j)),      # beta tile
                pl.BlockSpec((block_h, c_pad), lambda j, s: (j, 0)),  # w2 tile
                pl.BlockSpec((1, c_pad), lambda j, s: (0, 0)),        # b2 (resident)
            ],
            out_specs=pl.BlockSpec((B, c_pad), lambda j, s: (0, 0)),  # resident accum
            scratch_shapes=[pltpu.VMEM((B, c_pad), jnp.float32)],
        ),
        compiler_params=pltpu.CompilerParams(
            dimension_semantics=("arbitrary",),    # H axis is a reduction
            vmem_limit_bytes=48 * 1024 * 1024,     # explicit, safe on v5e/v6e/v7x
        ),
    )(seed, x_bf, w1_bf, gamma, beta, w2_bf, b2_p)
    return out[:, :C]
    # TODO(synk): for batches too large to keep resident in VMEM, restructure BN into a
    # two-pass (stats accumulation, then apply) scheme so the batch axis can be tiled
    # and marked "parallel" (megacore on v7x).


# ---------------------------------------------------------------------------
# Pure-JAX reference (same bf16 matmul operands and same hash-based dropout mask).
# ---------------------------------------------------------------------------
def fcblock_reference(seed, x, w1, gamma, beta, w2, b2):
    h = jnp.dot(x.astype(jnp.bfloat16), w1.astype(jnp.bfloat16),
                preferred_element_type=jnp.float32)
    mean = jnp.mean(h, axis=0, keepdims=True)
    var = jnp.maximum(jnp.mean(h * h, axis=0, keepdims=True) - mean * mean, 0.0)
    h = (h - mean) * jax.lax.rsqrt(var + 1e-5)
    h = h * gamma + beta
    keep = _keep_mask(h.shape, seed[0], jnp.int32(0))
    h = jnp.where(keep, jnp.where(h > 0, h, 0.1 * h) * 2.0, 0.0)
    out = jnp.dot(h.astype(jnp.bfloat16), w2.astype(jnp.bfloat16),
                  preferred_element_type=jnp.float32) + b2
    return out


def init_params(key, input_dim, num_bottleneck, class_num):
    """Synthetic init mirroring weights_init_kaiming / weights_init_classifier."""
    k1, k2, k3 = jax.random.split(key, 3)
    w1 = jax.random.normal(k1, (input_dim, num_bottleneck), jnp.float32) * jnp.sqrt(
        2.0 / num_bottleneck)                     # Kaiming-normal (fan_out); bias=0 (dropped)
    gamma = 1.0 + 0.02 * jax.random.normal(k2, (1, num_bottleneck), jnp.float32)
    beta = jnp.zeros((1, num_bottleneck), jnp.float32)
    w2 = 0.001 * jax.random.normal(k3, (num_bottleneck, class_num), jnp.float32)
    b2 = jnp.zeros((1, class_num), jnp.float32)
    return w1, gamma, beta, w2, b2


if __name__ == "__main__":
    key = jax.random.PRNGKey(0)
    kx, kp = jax.random.split(key)

    batch = 128            # MXU-friendly M (multiple of the systolic row count)
    input_dim = 64
    num_bottleneck = 512   # module default
    class_num = 32

    x = jax.random.normal(kx, (batch, input_dim), jnp.float32)
    w1, gamma, beta, w2, b2 = init_params(kp, input_dim, num_bottleneck, class_num)
    seed = jnp.array([1234], dtype=jnp.int32)     # deterministic dropout seed

    out = fcblock_forward(seed, x, w1, gamma, beta, w2, b2)
    jax.block_until_ready(out)

    assert out.shape == (batch, class_num)
    assert bool(jnp.all(jnp.isfinite(out)))

    ref = fcblock_reference(seed, x, w1, gamma, beta, w2, b2)
    assert bool(jnp.allclose(out, ref, rtol=5e-2, atol=5e-3)), "kernel != reference"

    print("KERNEL_OK")
</pallas_src>

<mosaic_0001>
module attributes {stable_mosaic.version = 11 : i64} {
  func.func @fcblock_kernel(%arg0: i32, %arg1: memref<1xi32, #tpu.memory_space<smem>>, %arg2: memref<128x64xbf16, #tpu.memory_space<vmem>>, %arg3: memref<64x128xbf16, #tpu.memory_space<vmem>>, %arg4: memref<1x128xf32, #tpu.memory_space<vmem>>, %arg5: memref<1x128xf32, #tpu.memory_space<vmem>>, %arg6: memref<128x128xbf16, #tpu.memory_space<vmem>>, %arg7: memref<1x128xf32, #tpu.memory_space<vmem>>, %arg8: memref<128x128xf32, #tpu.memory_space<vmem>>, %arg9: memref<128x128xf32, #tpu.memory_space<vmem>>) attributes {dimension_semantics = [#tpu.dimension_semantics<arbitrary>], iteration_bounds = array<i64: 4>, scalar_prefetch = 1 : i64, scratch_operands = 1 : i64, tpu.core_type = #tpu.core_type<tc>, window_params = [{pipeline_mode = #tpu.pipeline_mode<synchronous>, transform_indices = @transform_0, window_bounds = array<i64: 128, 64>}, {transform_indices = @transform_1, window_bounds = array<i64: 64, 128>}, {transform_indices = @transform_2, window_bounds = array<i64: 1, 128>}, {transform_indices = @transform_3, window_bounds = array<i64: 1, 128>}, {transform_indices = @transform_4, window_bounds = array<i64: 128, 128>}, {pipeline_mode = #tpu.pipeline_mode<synchronous>, transform_indices = @transform_5, window_bounds = array<i64: 1, 128>}, {pipeline_mode = #tpu.pipeline_mode<synchronous>, transform_indices = @transform_6, window_bounds = array<i64: 128, 128>}]} {
    %c0_i32 = arith.constant 0 : i32
    %0 = arith.cmpi eq, %arg0, %c0_i32 : i32
    %1 = arith.extui %0 : i1 to i32
    %c0_i32_0 = arith.constant 0 : i32
    %2 = arith.cmpi ne, %1, %c0_i32_0 : i32
    scf.if %2 {
      %cst_29 = arith.constant 0.000000e+00 : f32
      %80 = vector.broadcast %cst_29 : f32 to vector<128x128xf32>
      %c0_30 = arith.constant 0 : index
      %c0_31 = arith.constant 0 : index
      %81 = vector.load %arg9[%c0_30, %c0_31] : memref<128x128xf32, #tpu.memory_space<vmem>>, vector<128x128xf32>
      tpu.vector_store %arg9[%c0_30, %c0_31], %80 {strides = array<i32>} : memref<128x128xf32, #tpu.memory_space<vmem>>, vector<128x128xf32>,
    } else {
    }
    %c0 = arith.constant 0 : index
    %c0_1 = arith.constant 0 : index
    %3 = vector.load %arg2[%c0, %c0_1] : memref<128x64xbf16, #tpu.memory_space<vmem>>, vector<128x64xbf16>
    %c0_2 = arith.constant 0 : index
    %c0_3 = arith.constant 0 : index
    %4 = vector.load %arg3[%c0_2, %c0_3] : memref<64x128xbf16, #tpu.memory_space<vmem>>, vector<64x128xbf16>
    %cst = arith.constant dense<0.000000e+00> : vector<128x128xf32>
    %5 = tpu.matmul %3, %4, %cst {dimension_numbers = #tpu.dot_dimension_numbers<[1], [0], [0], [1], [0, 0, 1, 1], [], []>} : vector<128x64xbf16>, vector<64x128xbf16>, vector<128x128xf32> -> vector<128x128xf32>
    %cst_4 = arith.constant dense<0.000000e+00> : vector<128xf32>
    %6 = vector.multi_reduction <add>, %5, %cst_4 [0] : vector<128x128xf32> to vector<128xf32>
    %7 = vector.shape_cast %6 : vector<128xf32> to vector<1x128xf32>
    %cst_5 = arith.constant 7.812500e-03 : f32
    %8 = vector.broadcast %cst_5 : f32 to vector<1x128xf32>
    %9 = arith.mulf %7, %8 : vector<1x128xf32>
    %10 = arith.mulf %5, %5 : vector<128x128xf32>
    %cst_6 = arith.constant dense<0.000000e+00> : vector<128xf32>
    %11 = vector.multi_reduction <add>, %10, %cst_6 [0] : vector<128x128xf32> to vector<128xf32>
    %12 = vector.shape_cast %11 : vector<128xf32> to vector<1x128xf32>
    %cst_7 = arith.constant 7.812500e-03 : f32
    %13 = vector.broadcast %cst_7 : f32 to vector<1x128xf32>
    %14 = arith.mulf %12, %13 : vector<1x128xf32>
    %15 = arith.mulf %9, %9 : vector<1x128xf32>
    %16 = arith.subf %14, %15 : vector<1x128xf32>
    %cst_8 = arith.constant 0.000000e+00 : f32
    %17 = vector.broadcast %cst_8 : f32 to vector<1x128xf32>
    %18 = arith.maximumf %16, %17 : vector<1x128xf32>
    %19 = vector.broadcast %9 : vector<1x128xf32> to vector<128x128xf32>
    %20 = arith.subf %5, %19 : vector<128x128xf32>
    %cst_9 = arith.constant 9.99999974E-6 : f32
    %21 = vector.broadcast %cst_9 : f32 to vector<1x128xf32>
    %22 = arith.addf %18, %21 : vector<1x128xf32>
    %23 = math.rsqrt %22 : vector<1x128xf32>
    %24 = vector.broadcast %23 : vector<1x128xf32> to vector<128x128xf32>
    %25 = arith.mulf %20, %24 : vector<128x128xf32>
    %c0_10 = arith.constant 0 : index
    %c0_11 = arith.constant 0 : index
    %26 = vector.load %arg4[%c0_10, %c0_11] : memref<1x128xf32, #tpu.memory_space<vmem>>, vector<1x128xf32>
    %27 = vector.broadcast %26 : vector<1x128xf32> to vector<128x128xf32>
    %28 = arith.mulf %25, %27 : vector<128x128xf32>
    %c0_12 = arith.constant 0 : index
    %c0_13 = arith.constant 0 : index
    %29 = vector.load %arg5[%c0_12, %c0_13] : memref<1x128xf32, #tpu.memory_space<vmem>>, vector<1x128xf32>
    %30 = vector.broadcast %29 : vector<1x128xf32> to vector<128x128xf32>
    %31 = arith.addf %28, %30 : vector<128x128xf32>
    %c0_14 = arith.constant 0 : index
    %32 = memref.load %arg1[%c0_14] : memref<1xi32, #tpu.memory_space<smem>>
    %c128_i32 = arith.constant 128 : i32
    %33 = arith.muli %arg0, %c128_i32 : i32
    %34 = tpu.iota {dimensions = array<i32: 0>} : vector<128x128xi32>
    %35 = tpu.iota {dimensions = array<i32: 1>} : vector<128x128xi32>
    %36 = vector.broadcast %33 : i32 to vector<128x128xi32>
    %37 = arith.addi %35, %36 : vector<128x128xi32>
    %c-1640531527_i32 = arith.constant -1640531527 : i32
    %38 = vector.broadcast %c-1640531527_i32 : i32 to vector<128x128xi32>
    %39 = arith.muli %34, %38 : vector<128x128xi32>
    %40 = vector.broadcast %32 : i32 to vector<128x128xi32>
    %41 = arith.addi %40, %39 : vector<128x128xi32>
    %c-2048144789_i32 = arith.constant -2048144789 : i32
    %42 = vector.broadcast %c-2048144789_i32 : i32 to vector<128x128xi32>
    %43 = arith.muli %37, %42 : vector<128x128xi32>
    %44 = arith.addi %41, %43 : vector<128x128xi32>
    %c15_i32 = arith.constant 15 : i32
    %45 = vector.broadcast %c15_i32 : i32 to vector<128x128xi32>
    %46 = arith.shrui %44, %45 : vector<128x128xi32>
    %47 = arith.xori %46, %44 : vector<128x128xi32>
    %c739982445_i32 = arith.constant 739982445 : i32
    %48 = vector.broadcast %c739982445_i32 : i32 to vector<128x128xi32>
    %49 = arith.muli %47, %48 : vector<128x128xi32>
    %c12_i32 = arith.constant 12 : i32
    %50 = vector.broadcast %c12_i32 : i32 to vector<128x128xi32>
    %51 = arith.shrui %49, %50 : vector<128x128xi32>
    %52 = arith.xori %51, %49 : vector<128x128xi32>
    %c695872825_i32 = arith.constant 695872825 : i32
    %53 = vector.broadcast %c695872825_i32 : i32 to vector<128x128xi32>
    %54 = arith.muli %52, %53 : vector<128x128xi32>
    %c15_i32_15 = arith.constant 15 : i32
    %55 = vector.broadcast %c15_i32_15 : i32 to vector<128x128xi32>
    %56 = arith.shrui %54, %55 : vector<128x128xi32>
    %57 = arith.xori %56, %54 : vector<128x128xi32>
    %c31_i32 = arith.constant 31 : i32
    %58 = vector.broadcast %c31_i32 : i32 to vector<128x128xi32>
    %59 = arith.shrui %57, %58 : vector<128x128xi32>
    %c0_i32_16 = arith.constant 0 : i32
    %60 = vector.broadcast %c0_i32_16 : i32 to vector<128x128xi32>
    %61 = arith.cmpi eq, %59, %60 : vector<128x128xi32>
    %cst_17 = arith.constant 0.000000e+00 : f32
    %62 = vector.broadcast %cst_17 : f32 to vector<128x128xf32>
    %63 = arith.cmpf ogt, %31, %62 : vector<128x128xf32>
    %cst_18 = arith.constant 1.000000e-01 : f32
    %64 = vector.broadcast %cst_18 : f32 to vector<128x128xf32>
    %65 = arith.mulf %64, %31 : vector<128x128xf32>
    %66 = arith.select %63, %31, %65 : vector<128x128xi1>, vector<128x128xf32>
    %cst_19 = arith.constant 2.000000e+00 : f32
    %67 = vector.broadcast %cst_19 : f32 to vector<128x128xf32>
    %68 = arith.mulf %66, %67 : vector<128x128xf32>
    %cst_20 = arith.constant 0.000000e+00 : f32
    %69 = vector.broadcast %cst_20 : f32 to vector<128x128xf32>
    %70 = arith.select %61, %68, %69 : vector<128x128xi1>, vector<128x128xf32>
    %c0_21 = arith.constant 0 : index
    %c0_22 = arith.constant 0 : index
    %71 = vector.load %arg9[%c0_21, %c0_22] : memref<128x128xf32, #tpu.memory_space<vmem>>, vector<128x128xf32>
    %72 = arith.truncf %70 : vector<128x128xf32> to vector<128x128xbf16>
    %c0_23 = arith.constant 0 : index
    %c0_24 = arith.constant 0 : index
    %73 = vector.load %arg6[%c0_23, %c0_24] : memref<128x128xbf16, #tpu.memory_space<vmem>>, vector<128x128xbf16>
    %cst_25 = arith.constant dense<0.000000e+00> : vector<128x128xf32>
    %74 = tpu.matmul %72, %73, %cst_25 {dimension_numbers = #tpu.dot_dimension_numbers<[1], [0], [0], [1], [0, 0, 1, 1], [], []>} : vector<128x128xbf16>, vector<128x128xbf16>, vector<128x128xf32> -> vector<128x128xf32>
    %75 = arith.addf %71, %74 : vector<128x128xf32>
    %c0_26 = arith.constant 0 : index
    %c0_27 = arith.constant 0 : index
    %76 = vector.load %arg9[%c0_26, %c0_27] : memref<128x128xf32, #tpu.memory_space<vmem>>, vector<128x128xf32>
    tpu.vector_store %arg9[%c0_26, %c0_27], %75 {strides = array<i32>} : memref<128x128xf32, #tpu.memory_space<vmem>>, vector<128x128xf32>,
    %c3_i32 = arith.constant 3 : i32
    %77 = arith.cmpi eq, %arg0, %c3_i32 : i32
    %78 = arith.extui %77 : i1 to i32
    %c0_i32_28 = arith.constant 0 : i32
    %79 = arith.cmpi ne, %78, %c0_i32_28 : i32
    scf.if %79 {
      %c0_29 = arith.constant 0 : index
      %c0_30 = arith.constant 0 : index
      %80 = vector.load %arg9[%c0_29, %c0_30] : memref<128x128xf32, #tpu.memory_space<vmem>>, vector<128x128xf32>
      %c0_31 = arith.constant 0 : index
      %c0_32 = arith.constant 0 : index
      %81 = vector.load %arg7[%c0_31, %c0_32] : memref<1x128xf32, #tpu.memory_space<vmem>>, vector<1x128xf32>
      %82 = vector.broadcast %81 : vector<1x128xf32> to vector<128x128xf32>
      %83 = arith.addf %80, %82 : vector<128x128xf32>
      %c0_33 = arith.constant 0 : index
      %c0_34 = arith.constant 0 : index
      %84 = vector.load %arg8[%c0_33, %c0_34] : memref<128x128xf32, #tpu.memory_space<vmem>>, vector<128x128xf32>
      tpu.vector_store %arg8[%c0_33, %c0_34], %83 {strides = array<i32>} : memref<128x128xf32, #tpu.memory_space<vmem>>, vector<128x128xf32>,
    } else {
    }
    return
  }
  func.func @transform_0(%arg0: i32, %arg1: memref<1xi32, #tpu.memory_space<smem>>) -> (i32, i32) {
    %c0_i32 = arith.constant 0 : i32
    %c0_i32_0 = arith.constant 0 : i32
    %c0_i32_1 = arith.constant 0 : i32
    return %c0_i32, %c0_i32_0 : i32, i32
  }
  func.func @transform_1(%arg0: i32, %arg1: memref<1xi32, #tpu.memory_space<smem>>) -> (i32, i32) {
    %c0_i32 = arith.constant 0 : i32
    %c0_i32_0 = arith.constant 0 : i32
    return %c0_i32, %arg0 : i32, i32
  }
  func.func @transform_2(%arg0: i32, %arg1: memref<1xi32, #tpu.memory_space<smem>>) -> (i32, i32) {
    %c0_i32 = arith.constant 0 : i32
    %c0_i32_0 = arith.constant 0 : i32
    return %c0_i32, %arg0 : i32, i32
  }
  func.func @transform_3(%arg0: i32, %arg1: memref<1xi32, #tpu.memory_space<smem>>) -> (i32, i32) {
    %c0_i32 = arith.constant 0 : i32
    %c0_i32_0 = arith.constant 0 : i32
    return %c0_i32, %arg0 : i32, i32
  }
  func.func @transform_4(%arg0: i32, %arg1: memref<1xi32, #tpu.memory_space<smem>>) -> (i32, i32) {
    %c0_i32 = arith.constant 0 : i32
    %c0_i32_0 = arith.constant 0 : i32
    return %arg0, %c0_i32 : i32, i32
  }
  func.func @transform_5(%arg0: i32, %arg1: memref<1xi32, #tpu.memory_space<smem>>) -> (i32, i32) {
    %c0_i32 = arith.constant 0 : i32
    %c0_i32_0 = arith.constant 0 : i32
    %c0_i32_1 = arith.constant 0 : i32
    return %c0_i32, %c0_i32_0 : i32, i32
  }
  func.func @transform_6(%arg0: i32, %arg1: memref<1xi32, #tpu.memory_space<smem>>) -> (i32, i32) {
    %c0_i32 = arith.constant 0 : i32
    %c0_i32_0 = arith.constant 0 : i32
    %c0_i32_1 = arith.constant 0 : i32
    return %c0_i32, %c0_i32_0 : i32, i32
  }
}

</mosaic_0001>

<llo_original>
// kernel: fcblock_forward.1
$region0: #{fcblock_forward.1}
  #allocation0 [shape = 'u32[]', space=smem, size = 0x4, offset = 0x4, fixed_abs, tag = 'smem constant byte address 0x4 - core index']
  #allocation1 [shape = 'u32[144,128]{1,0:T(1,128)}', space=vmem, size = 0x12000, scoped, tag = 'internal scratch']
  #allocation2 [shape = 'f32[128,128]{1,0:T(8,128)}', space=vmem, size = 0x10000, scoped, tag = 'scratch operand']
  #allocation3 [shape = 's32[1]{0}', space=sflag, size = 0x4, scoped, tag = 'scoped memory for fcblock_forward.1']
  #allocation4 [shape = 's32[1]{0:T(128)S(6)}', space=smem, size = 0x200, scoped, tag = 'prefetched SMEM operand 0']
  %s0 = inlined_call_operand.<no memory space> [shape: s32[1], index: 0, kind: input, shape index: {}]
  %s1 = inlined_call_operand.vmem [shape: bf16[128,64], index: 1, kind: input, shape index: {}]
  %s2 = inlined_call_operand.vmem [shape: bf16[64,512], index: 2, kind: input, shape index: {}]
  %s3 = inlined_call_operand.vmem [shape: f32[1,512], index: 3, kind: input, shape index: {}]
  %s4 = inlined_call_operand.vmem [shape: f32[1,512], index: 4, kind: input, shape index: {}]
  %s5 = inlined_call_operand.vmem [shape: bf16[512,128], index: 5, kind: input, shape index: {}]
  %s6 = inlined_call_operand.vmem [shape: f32[1,128], index: 6, kind: input, shape index: {}]
  %s7 = inlined_call_operand.vmem [shape: f32[128,128], index: 7, kind: output, shape index: {}]
  %s8 = sld [smem:[#allocation0]]
  $region106: #{fcblock_forward.1} parent=0
    _
  %s10 = ssub.s32 1, %s8
  %s11 = scalar_select 0, %s10, %s8
  %12 = sst [smem:[#allocation4]] %s0
  $region1: #{fcblock_forward.1} parent=0
    #allocation5 [shape = 'u8[32768]{0}', space=vmem, size = 0x8000, scoped, tag = 'input window, operand 2']
    loop: start=0, step=1, limit=6
    $region2: #{fcblock_forward.1} parent=1 // loop_pre_header
      _
    $region3: #{fcblock_forward.1} parent=1 // loop_header
      %s14 = sphi 0, %s18
      %p15 = scmp.ge.s32.totalorder %s14, 6
      %s22 = sphi 0, %s22
      %s24 = sphi 0, %s22
      %s25 = sphi 0, %s24
      %s39 = sphi 0, %s25
      %s45 = sphi 0, %s47
      %s48 = sphi 0, %s45
      %s49 = sphi 0, %s48
      %s65 = sphi 0, %s49
      %s71 = sphi 0, %s73
      %s74 = sphi 0, %s71
      %s75 = sphi 0, %s74
      %s91 = sphi 0, %s75
      %s97 = sphi 0, %s99
      %s100 = sphi 0, %s97
      %s101 = sphi 0, %s100
      %s117 = sphi 0, %s101
      %s123 = sphi 0, %s125
      %s126 = sphi 0, %s123
      %s127 = sphi 0, %s126
      %s143 = sphi 0, %s127
      %s147 = sphi 0, %s147
      %s149 = sphi 0, %s147
      %s150 = sphi 0, %s149
      %s164 = sphi 0, %s150
      %s168 = sphi 0, %s168
      %s170 = sphi 0, %s168
      %s171 = sphi 0, %s170
      %s185 = sphi 0, %s171
    $region4: #{fcblock_forward.1} parent=1 // loop_header_branch
      %17 = sbr.rel (%p15) target = $region8
    $region5: #{fcblock_forward.1} parent=1 // loop_body
      %s19 = ssub.s32 %s14, 1
      %s20 = ssub.s32 %s14, 2
      %s21 = sadd.s32 %s14, 1
      %s23 = sadd.s32 %s22, 1
      %p26 = scmp.eq.s32.totalorder %s14, 3
      %p27 = scmp.ne.s32.totalorder %s22, %s24
      %p28 = scmp.eq.s32.totalorder %s14, 0
      %p29 = por %p27, %p28
      %p30 = scmp.ne.s32.totalorder %s22, %s24
      %p31 = scmp.eq.s32.totalorder %s19, 3
      %p32 = por %p30, %p31
      %p33 = scmp.ne.s32.totalorder %s24, %s25
      %p34 = scmp.eq.s32.totalorder %s19, 0
      %p35 = por %p33, %p34
      %p36 = scmp.ne.s32.totalorder %s24, %s25
      %p37 = scmp.eq.s32.totalorder %s20, 3
      %p38 = por %p36, %p37
      %p40 = scmp.ne.s32.totalorder %s25, %s39
      %p41 = scmp.eq.s32.totalorder %s20, 0
      %p42 = por %p40, %p41
      %s43 = ssub.s32 %s14, %s21
      %p44 = scmp.eq.s32.totalorder %s43, 0
      %s46 = sadd.s32 %s45, 1
      %s47 = scalar_select %p44, %s45, %s46
      %p50 = pneg %p44
      %p51 = scmp.eq.s32.totalorder %s14, 3
      %p52 = por %p50, %p51
      %p53 = scmp.ne.s32.totalorder %s45, %s48
      %p54 = scmp.eq.s32.totalorder %s14, 0
      %p55 = por %p53, %p54
      %p56 = scmp.ne.s32.totalorder %s45, %s48
      %p57 = scmp.eq.s32.totalorder %s19, 3
      %p58 = por %p56, %p57
      %p59 = scmp.ne.s32.totalorder %s48, %s49
      %p60 = scmp.eq.s32.totalorder %s19, 0
      %p61 = por %p59, %p60
      %p62 = scmp.ne.s32.totalorder %s48, %s49
      %p63 = scmp.eq.s32.totalorder %s20, 3
      %p64 = por %p62, %p63
      %p66 = scmp.ne.s32.totalorder %s49, %s65
      %p67 = scmp.eq.s32.totalorder %s20, 0
      %p68 = por %p66, %p67
      %s69 = ssub.s32 %s14, %s21
      %p70 = scmp.eq.s32.totalorder %s69, 0
      %s72 = sadd.s32 %s71, 1
      %s73 = scalar_select %p70, %s71, %s72
      %p76 = pneg %p70
      %p77 = scmp.eq.s32.totalorder %s14, 3
      %p78 = por %p76, %p77
      %p79 = scmp.ne.s32.totalorder %s71, %s74
      %p80 = scmp.eq.s32.totalorder %s14, 0
      %p81 = por %p79, %p80
      %p82 = scmp.ne.s32.totalorder %s71, %s74
      %p83 = scmp.eq.s32.totalorder %s19, 3
      %p84 = por %p82, %p83
      %p85 = scmp.ne.s32.totalorder %s74, %s75
      %p86 = scmp.eq.s32.totalorder %s19, 0
      %p87 = por %p85, %p86
      %p88 = scmp.ne.s32.totalorder %s74, %s75
      %p89 = scmp.eq.s32.totalorder %s20, 3
      %p90 = por %p88, %p89
      %p92 = scmp.ne.s32.totalorder %s75, %s91
      %p93 = scmp.eq.s32.totalorder %s20, 0
      %p94 = por %p92, %p93
      %s95 = ssub.s32 %s14, %s21
      %p96 = scmp.eq.s32.totalorder %s95, 0
      %s98 = sadd.s32 %s97, 1
      %s99 = scalar_select %p96, %s97, %s98
      %p102 = pneg %p96
      %p103 = scmp.eq.s32.totalorder %s14, 3
      %p104 = por %p102, %p103
      %p105 = scmp.ne.s32.totalorder %s97, %s100
      %p106 = scmp.eq.s32.totalorder %s14, 0
      %p107 = por %p105, %p106
      %p108 = scmp.ne.s32.totalorder %s97, %s100
      %p109 = scmp.eq.s32.totalorder %s19, 3
      %p110 = por %p108, %p109
      %p111 = scmp.ne.s32.totalorder %s100, %s101
      %p112 = scmp.eq.s32.totalorder %s19, 0
      %p113 = por %p111, %p112
      %p114 = scmp.ne.s32.totalorder %s100, %s101
      %p115 = scmp.eq.s32.totalorder %s20, 3
      %p116 = por %p114, %p115
      %p118 = scmp.ne.s32.totalorder %s101, %s117
      %p119 = scmp.eq.s32.totalorder %s20, 0
      %p120 = por %p118, %p119
      %s121 = ssub.s32 %s14, %s21
      %p122 = scmp.eq.s32.totalorder %s121, 0
      %s124 = sadd.s32 %s123, 1
      %s125 = scalar_select %p122, %s123, %s124
      %p128 = pneg %p122
      %p129 = scmp.eq.s32.totalorder %s14, 3
      %p130 = por %p128, %p129
      %p131 = scmp.ne.s32.totalorder %s123, %s126
      %p132 = scmp.eq.s32.totalorder %s14, 0
      %p133 = por %p131, %p132
      %p134 = scmp.ne.s32.totalorder %s123, %s126
      %p135 = scmp.eq.s32.totalorder %s19, 3
      %p136 = por %p134, %p135
      %p137 = scmp.ne.s32.totalorder %s126, %s127
      %p138 = scmp.eq.s32.totalorder %s19, 0
      %p139 = por %p137, %p138
      %p140 = scmp.ne.s32.totalorder %s126, %s127
      %p141 = scmp.eq.s32.totalorder %s20, 3
      %p142 = por %p140, %p141
      %p144 = scmp.ne.s32.totalorder %s127, %s143
      %p145 = scmp.eq.s32.totalorder %s20, 0
      %p146 = por %p144, %p145
      %s148 = sadd.s32 %s147, 1
      %p151 = scmp.eq.s32.totalorder %s14, 3
      %p152 = scmp.ne.s32.totalorder %s147, %s149
      %p153 = scmp.eq.s32.totalorder %s14, 0
      %p154 = por %p152, %p153
      %p155 = scmp.ne.s32.totalorder %s147, %s149
      %p156 = scmp.eq.s32.totalorder %s19, 3
      %p157 = por %p155, %p156
      %p158 = scmp.ne.s32.totalorder %s149, %s150
      %p159 = scmp.eq.s32.totalorder %s19, 0
      %p160 = por %p158, %p159
      %p161 = scmp.ne.s32.totalorder %s149, %s150
      %p162 = scmp.eq.s32.totalorder %s20, 3
      %p163 = por %p161, %p162
      %p165 = scmp.ne.s32.totalorder %s150, %s164
      %p166 = scmp.eq.s32.totalorder %s20, 0
      %p167 = por %p165, %p166
      %s169 = sadd.s32 %s168, 1
      %p172 = scmp.eq.s32.totalorder %s14, 3
      %p173 = scmp.ne.s32.totalorder %s168, %s170
      %p174 = scmp.eq.s32.totalorder %s14, 0
      %p175 = por %p173, %p174
      %p176 = scmp.ne.s32.totalorder %s168, %s170
      %p177 = scmp.eq.s32.totalorder %s19, 3
      %p178 = por %p176, %p177
      %p179 = scmp.ne.s32.totalorder %s170, %s171
      %p180 = scmp.eq.s32.totalorder %s19, 0
      %p181 = por %p179, %p180
      %p182 = scmp.ne.s32.totalorder %s170, %s171
      %p183 = scmp.eq.s32.totalorder %s20, 3
      %p184 = por %p182, %p183
      %p186 = scmp.ne.s32.totalorder %s171, %s185
      %p187 = scmp.eq.s32.totalorder %s20, 0
      %p188 = por %p186, %p187
      %p189 = scmp.le.s32.totalorder 1, %s14
      %p190 = scmp.lt.s32.totalorder %s14, 5
      %p191 = pnand %p189, %p190
      %p192 = pneg %p191
      // Predicated region
      $region9: #{fcblock_forward.1} parent=5 // pred_check
        _
      $region10: #{fcblock_forward.1} parent=5 // pred_check_branch
        %194 = sbr.rel (%p191) target = $region12
      $region11: #{fcblock_forward.1} parent=5 // pred_region
        %s195 = ssub.s32 %s14, 1
        // Predicated region
        $region13: #{fcblock_forward.1} parent=11 // pred_check
          %p196 = pneg %p35
        $region14: #{fcblock_forward.1} parent=11 // pred_check_branch
          %198 = sbr.rel (%p196) target = $region16
        $region15: #{fcblock_forward.1} parent=11 // pred_region
          _
        $region16: #{fcblock_forward.1} parent=11 // pred_fallthru
          _
        // Predicated region
        $region17: #{fcblock_forward.1} parent=11 // pred_check
          %p199 = pneg %p160
        $region18: #{fcblock_forward.1} parent=11 // pred_check_branch
          %201 = sbr.rel (%p199) target = $region20
        $region19: #{fcblock_forward.1} parent=11 // pred_region
          _
        $region20: #{fcblock_forward.1} parent=11 // pred_fallthru
          _
      $region12: #{fcblock_forward.1} parent=5 // pred_fallthru
        _
      %p202 = scmp.lt.s32.totalorder %s14, 4
      // Predicated region
      $region21: #{fcblock_forward.1} parent=5 // pred_check
        %p203 = pneg %p202
      $region22: #{fcblock_forward.1} parent=5 // pred_check_branch
        %205 = sbr.rel (%p203) target = $region24
      $region23: #{fcblock_forward.1} parent=5 // pred_region
        // Predicated region
        $region25: #{fcblock_forward.1} parent=23 // pred_check
          %p206 = pneg %p55
        $region26: #{fcblock_forward.1} parent=23 // pred_check_branch
          %208 = sbr.rel (%p206) target = $region28
        $region27: #{fcblock_forward.1} parent=23 // pred_region
          %s209 = sand.u32 %s45, 1
          %s210 = sand.u32 %s45, 1
          %s211 = smul.addr %s210, 32
          %s212 = scalar_lea.vmem [#allocation5], %s211
          %s213 = smul.addr %s14, 4
          %s214 = scalar_lea.vmem %s2, %s213
          // Predicated region
          $region29: #{fcblock_forward.1} parent=27 // pred_check
            _
          $region30: #{fcblock_forward.1} parent=27 // pred_check_branch
            %216 = sbr.rel (0) target = $region32
          $region31: #{fcblock_forward.1} parent=27 // pred_region
            // Predicated region
            $region33: #{fcblock_forward.1} parent=31 // pred_check
              _
            $region34: #{fcblock_forward.1} parent=31 // pred_check_branch
              %218 = sbr.rel target = $region36
            $region35: #{fcblock_forward.1} parent=31 // pred_region
              // Predicated region
              $region48: #{fcblock_forward.1} parent=35 // pred_check
                _
              $region49: #{fcblock_forward.1} parent=35 // pred_check_branch
                %248 = sbr.rel (0) target = $region51
              $region50: #{fcblock_forward.1} parent=35 // pred_region
                loop: start=0, step=1, limit=1
                $region52: #{fcblock_forward.1} parent=50 // loop_pre_header
                  _
                $region53: #{fcblock_forward.1} parent=50 // loop_header
                  %s250 = sphi 0, %s254
                  %p251 = scmp.ge.s32.totalorder %s250, 1
                  %s255 = sphi %s214, %s214
                  %s256 = sphi %s212, %s212
                $region54: #{fcblock_forward.1} parent=50 // loop_header_branch
                  %253 = sbr.rel (%p251) target = $region58
                $region55: #{fcblock_forward.1} parent=50 // loop_body
                  _
                $region56: #{fcblock_forward.1} parent=50 // loop_footer
                  %s254 = sadd.s32 1, %s250
                $region57: #{fcblock_forward.1} parent=50 // loop_footer_branch
                  %249 = sbr.rel target = $region53
                $region58: #{fcblock_forward.1} parent=50 // loop_exit
                  _
                %s258 = ssub.s32 16, 1
                loop: start=0, step=1, limit=1
                $region59: #{fcblock_forward.1} parent=50 // loop_pre_header
                  _
                $region60: #{fcblock_forward.1} parent=50 // loop_header
                  %s260 = sphi 0, %s264
                  %p261 = scmp.ge.s32.totalorder %s260, 1
                  %s265 = sphi %s214, %s214
                  %s266 = sphi %s212, %s212
                $region61: #{fcblock_forward.1} parent=50 // loop_header_branch
                  %263 = sbr.rel (%p261) target = $region65
                $region62: #{fcblock_forward.1} parent=50 // loop_body
                  %v267 = vld [vmem:[%s265] sm:%s258]
                  %268 = vst [vmem:[%s266] sm:%s258] %v267
                  %v269 = vld [vmem:[%s265 + $0x10] sm:%s258]
                  %270 = vst [vmem:[%s266 + $0x4] sm:%s258] %v269
                  %v271 = vld [vmem:[%s265 + $0x20] sm:%s258]
                  %272 = vst [vmem:[%s266 + $0x8] sm:%s258] %v271
                  %v273 = vld [vmem:[%s265 + $0x30] sm:%s258]
                  %274 = vst [vmem:[%s266 + $0xc] sm:%s258] %v273
                  %v275 = vld [vmem:[%s265 + $0x40] sm:%s258]
                  %276 = vst [vmem:[%s266 + $0x10] sm:%s258] %v275
                  %v277 = vld [vmem:[%s265 + $0x50] sm:%s258]
                  %278 = vst [vmem:[%s266 + $0x14] sm:%s258] %v277
                  %v279 = vld [vmem:[%s265 + $0x60] sm:%s258]
                  %280 = vst [vmem:[%s266 + $0x18] sm:%s258] %v279
                  %v281 = vld [vmem:[%s265 + $0x70] sm:%s258]
                  %282 = vst [vmem:[%s266 + $0x1c] sm:%s258] %v281
                $region63: #{fcblock_forward.1} parent=50 // loop_footer
                  %s264 = sadd.s32 1, %s260
                $region64: #{fcblock_forward.1} parent=50 // loop_footer_branch
                  %259 = sbr.rel target = $region60
                $region65: #{fcblock_forward.1} parent=50 // loop_exit
                  _
              $region51: #{fcblock_forward.1} parent=35 // pred_fallthru
                _
            $region36: #{fcblock_forward.1} parent=31 // pred_fallthru
              _
            // Predicated region
            $region37: #{fcblock_forward.1} parent=31 // pred_check
              _
            $region38: #{fcblock_forward.1} parent=31 // pred_check_branch
              %220 = sbr.rel (0) target = $region40
            $region39: #{fcblock_forward.1} parent=31 // pred_region
              %s222 = ssub.s32 16, 1
              loop: start=0, step=1, limit=1
              $region41: #{fcblock_forward.1} parent=39 // loop_pre_header
                _
              $region42: #{fcblock_forward.1} parent=39 // loop_header
                %s224 = sphi 0, %s228
                %p225 = scmp.ge.s32.totalorder %s224, 1
                %s229 = sphi %s214, %s214
                %s230 = sphi %s212, %s212
              $region43: #{fcblock_forward.1} parent=39 // loop_header_branch
                %227 = sbr.rel (%p225) target = $region47
              $region44: #{fcblock_forward.1} parent=39 // loop_body
                %v231 = vld [vmem:[%s229] sm:%s222]
                %232 = vst [vmem:[%s230] sm:%s222] %v231
                %v233 = vld [vmem:[%s229 + $0x10] sm:%s222]
                %234 = vst [vmem:[%s230 + $0x4] sm:%s222] %v233
                %v235 = vld [vmem:[%s229 + $0x20] sm:%s222]
                %236 = vst [vmem:[%s230 + $0x8] sm:%s222] %v235
                %v237 = vld [vmem:[%s229 + $0x30] sm:%s222]
                %238 = vst [vmem:[%s230 + $0xc] sm:%s222] %v237
                %v239 = vld [vmem:[%s229 + $0x40] sm:%s222]
                %240 = vst [vmem:[%s230 + $0x10] sm:%s222] %v239
                %v241 = vld [vmem:[%s229 + $0x50] sm:%s222]
                %242 = vst [vmem:[%s230 + $0x14] sm:%s222] %v241
                %v243 = vld [vmem:[%s229 + $0x60] sm:%s222]
                %244 = vst [vmem:[%s230 + $0x18] sm:%s222] %v243
                %v245 = vld [vmem:[%s229 + $0x70] sm:%s222]
                %246 = vst [vmem:[%s230 + $0x1c] sm:%s222] %v245
              $region45: #{fcblock_forward.1} parent=39 // loop_footer
                %s228 = sadd.s32 1, %s224
              $region46: #{fcblock_forward.1} parent=39 // loop_footer_branch
                %223 = sbr.rel target = $region42
              $region47: #{fcblock_forward.1} parent=39 // loop_exit
                _
            $region40: #{fcblock_forward.1} parent=31 // pred_fallthru
              _
          $region32: #{fcblock_forward.1} parent=27 // pred_fallthru
            _
          %283 = vnop
        $region28: #{fcblock_forward.1} parent=23 // pred_fallthru
          _
        // Predicated region
        $region66: #{fcblock_forward.1} parent=23 // pred_check
          %p284 = pneg %p81
        $region67: #{fcblock_forward.1} parent=23 // pred_check_branch
          %286 = sbr.rel (%p284) target = $region69
        $region68: #{fcblock_forward.1} parent=23 // pred_region
          %p287 = scmp.lt.s32.totalorder %s14, 3
          %s288 = scalar_select %p287, %s14, 3
          %s289 = scalar_lea.vmem %s3, %s288
        $region69: #{fcblock_forward.1} parent=23 // pred_fallthru
          _
        // Predicated region
        $region70: #{fcblock_forward.1} parent=23 // pred_check
          %p290 = pneg %p107
        $region71: #{fcblock_forward.1} parent=23 // pred_check_branch
          %292 = sbr.rel (%p290) target = $region73
        $region72: #{fcblock_forward.1} parent=23 // pred_region
          %p293 = scmp.lt.s32.totalorder %s14, 3
          %s294 = scalar_select %p293, %s14, 3
          %s295 = scalar_lea.vmem %s4, %s294
        $region73: #{fcblock_forward.1} parent=23 // pred_fallthru
          _
        // Predicated region
        $region74: #{fcblock_forward.1} parent=23 // pred_check
          %p296 = pneg %p133
        $region75: #{fcblock_forward.1} parent=23 // pred_check_branch
          %298 = sbr.rel (%p296) target = $region77
        $region76: #{fcblock_forward.1} parent=23 // pred_region
          %s299 = smul.u32 16, %s14
          %p300 = scmp.lt.s32.totalorder %s299, 63
          %s301 = scalar_select %p300, %s299, 63
          %s302 = smul.addr %s301, 4
          %s303 = scalar_lea.vmem %s5, %s302
          %s304 = smul.u32 16, %s14
        $region77: #{fcblock_forward.1} parent=23 // pred_fallthru
          _
      $region24: #{fcblock_forward.1} parent=5 // pred_fallthru
        _
      %p305 = scmp.le.s32.totalorder 1, %s14
      %p306 = scmp.lt.s32.totalorder %s14, 5
      %p307 = pnand %p305, %p306
      %p308 = pneg %p307
      // Predicated region
      $region78: #{fcblock_forward.1} parent=5 // pred_check
        _
      $region79: #{fcblock_forward.1} parent=5 // pred_check_branch
        %310 = sbr.rel (%p307) target = $region81
      $region80: #{fcblock_forward.1} parent=5 // pred_region
        %s311 = ssub.s32 %s14, 1
        %s312 = sand.u32 %s48, 1
        %s313 = sand.u32 %s48, 1
        %s314 = smul.addr %s313, 32
        %s315 = scalar_lea.vmem [#allocation5], %s314
        // Predicated region
        $region82: #{fcblock_forward.1} parent=80 // pred_check
          %p316 = pneg %p61
        $region83: #{fcblock_forward.1} parent=80 // pred_check_branch
          %318 = sbr.rel (%p316) target = $region85
        $region84: #{fcblock_forward.1} parent=80 // pred_region
          _
        $region85: #{fcblock_forward.1} parent=80 // pred_fallthru
          _
        %p319 = pneg %p35
        %p320 = pneg %p32
        %s321 = sand.u32 %s48, 1
        %s322 = sand.u32 %s48, 1
        %s323 = smul.addr %s322, 32
        %s324 = scalar_lea.vmem [#allocation5], %s323
        %p325 = pneg %p61
        %p326 = pneg %p58
        %p327 = scmp.lt.s32.totalorder %s19, 3
        %s328 = scalar_select %p327, %s19, 3
        %s329 = scalar_lea.vmem %s3, %s328
        %p330 = pneg %p87
        %p331 = pneg %p84
        %p332 = scmp.lt.s32.totalorder %s19, 3
        %s333 = scalar_select %p332, %s19, 3
        %s334 = scalar_lea.vmem %s4, %s333
        %p335 = pneg %p113
        %p336 = pneg %p110
        %s337 = smul.u32 16, %s19
        %p338 = scmp.lt.s32.totalorder %s337, 63
        %s339 = scalar_select %p338, %s337, 63
        %s340 = smul.addr %s339, 4
        %s341 = scalar_lea.vmem %s5, %s340
        %p342 = pneg %p139
        %p343 = pneg %p136
        %p344 = pneg %p160
        %p345 = pneg %p157
        %p346 = pneg %p181
        %p347 = pneg %p178
        %p348 = scmp.lt.s32.totalorder %s19, 3
        %s349 = scalar_select %p348, %s19, 3
        %s350 = scalar_lea.vmem %s3, %s349
        %p351 = scmp.lt.s32.totalorder %s19, 3
        %s352 = scalar_select %p351, %s19, 3
        %s353 = scalar_lea.vmem %s4, %s352
        %s354 = smul.u32 16, %s19
        %p355 = scmp.lt.s32.totalorder %s354, 63
        %s356 = scalar_select %p355, %s354, 63
        %s357 = smul.addr %s356, 4
        %s358 = scalar_lea.vmem %s5, %s357
        %s359 = smul.u32 16, %s19
        %p361 = scmp.eq.s32.totalorder %s19, 0
        // Predicated region
        $region86: #{fcblock_forward.1} parent=80 // pred_check
          %p362 = pneg %p361
        $region87: #{fcblock_forward.1} parent=80 // pred_check_branch
          %364 = sbr.rel (%p362) target = $region89
        $region88: #{fcblock_forward.1} parent=80 // pred_region
          %365 = vst [vmem:[#allocation2] sm:$0xff] 0.0
          %366 = vst [vmem:[#allocation2 + $0x8] sm:$0xff] 0.0
          %367 = vst [vmem:[#allocation2 + $0x10] sm:$0xff] 0.0
          %368 = vst [vmem:[#allocation2 + $0x18] sm:$0xff] 0.0
          %369 = vst [vmem:[#allocation2 + $0x20] sm:$0xff] 0.0
          %370 = vst [vmem:[#allocation2 + $0x28] sm:$0xff] 0.0
          %371 = vst [vmem:[#allocation2 + $0x30] sm:$0xff] 0.0
          %372 = vst [vmem:[#allocation2 + $0x38] sm:$0xff] 0.0
          %373 = vst [vmem:[#allocation2 + $0x40] sm:$0xff] 0.0
          %374 = vst [vmem:[#allocation2 + $0x48] sm:$0xff] 0.0
          %375 = vst [vmem:[#allocation2 + $0x50] sm:$0xff] 0.0
          %376 = vst [vmem:[#allocation2 + $0x58] sm:$0xff] 0.0
          %377 = vst [vmem:[#allocation2 + $0x60] sm:$0xff] 0.0
          %378 = vst [vmem:[#allocation2 + $0x68] sm:$0xff] 0.0
          %379 = vst [vmem:[#allocation2 + $0x70] sm:$0xff] 0.0
          %380 = vst [vmem:[#allocation2 + $0x78] sm:$0xff] 0.0
        $region89: #{fcblock_forward.1} parent=80 // pred_fallthru
          _
        %v381 = vld [vmem:[%s1] sm:$0xf]
        %v382 = vld [vmem:[%s1 + $0x4] sm:$0xf]
        %v383 = vld [vmem:[%s1 + $0x8] sm:$0xf]
        %v384 = vld [vmem:[%s1 + $0xc] sm:$0xf]
        %v385 = vld [vmem:[%s1 + $0x10] sm:$0xf]
        %v386 = vld [vmem:[%s1 + $0x14] sm:$0xf]
        %v387 = vld [vmem:[%s1 + $0x18] sm:$0xf]
        %v388 = vld [vmem:[%s1 + $0x1c] sm:$0xf]
        %v389 = vld [vmem:[%s1 + $0x20] sm:$0xf]
        %v390 = vld [vmem:[%s1 + $0x24] sm:$0xf]
        %v391 = vld [vmem:[%s1 + $0x28] sm:$0xf]
        %v392 = vld [vmem:[%s1 + $0x2c] sm:$0xf]
        %v393 = vld [vmem:[%s1 + $0x30] sm:$0xf]
        %v394 = vld [vmem:[%s1 + $0x34] sm:$0xf]
        %v395 = vld [vmem:[%s1 + $0x38] sm:$0xf]
        %v396 = vld [vmem:[%s1 + $0x3c] sm:$0xf]
        %v397 = vld [vmem:[%s315] sm:$0xf]
        %v398 = vld [vmem:[%s315 + $0x4] sm:$0xf]
        %v399 = vld [vmem:[%s315 + $0x8] sm:$0xf]
        %v400 = vld [vmem:[%s315 + $0xc] sm:$0xf]
        %v401 = vld [vmem:[%s315 + $0x10] sm:$0xf]
        %v402 = vld [vmem:[%s315 + $0x14] sm:$0xf]
        %v403 = vld [vmem:[%s315 + $0x18] sm:$0xf]
        %v404 = vld [vmem:[%s315 + $0x1c] sm:$0xf]
        %v421 = vunpack.c.l.b16 %v381
        %v422 = vunpack.c.l.b16 %v382
        %v423 = vunpack.c.l.b16 %v383
        %v424 = vunpack.c.l.b16 %v384
        %v425 = vunpack.c.l.b16 %v385
        %v426 = vunpack.c.l.b16 %v386
        %v427 = vunpack.c.l.b16 %v387
        %v428 = vunpack.c.l.b16 %v388
        %v429 = vunpack.c.l.b16 %v389
        %v430 = vunpack.c.l.b16 %v390
        %v431 = vunpack.c.l.b16 %v391
        %v432 = vunpack.c.l.b16 %v392
        %v433 = vunpack.c.l.b16 %v393
        %v434 = vunpack.c.l.b16 %v394
        %v435 = vunpack.c.l.b16 %v395
        %v436 = vunpack.c.l.b16 %v396
        %v437 = vpack.c.b16 %v422, %v421
        %v438 = vpack.c.b16 %v424, %v423
        %v439 = vpack.c.b16 %v426, %v425
        %v440 = vpack.c.b16 %v428, %v427
        %v441 = vpack.c.b16 %v430, %v429
        %v442 = vpack.c.b16 %v432, %v431
        %v443 = vpack.c.b16 %v434, %v433
        %v444 = vpack.c.b16 %v436, %v435
        %v453 = vunpack.c.l.b16 %v397
        %v454 = vunpack.c.l.b16 %v398
        %v455 = vunpack.c.l.b16 %v399
        %v456 = vunpack.c.l.b16 %v400
        %v457 = vunpack.c.l.b16 %v401
        %v458 = vunpack.c.l.b16 %v402
        %v459 = vunpack.c.l.b16 %v403
        %v460 = vunpack.c.l.b16 %v404
        %v461 = vpack.c.b16 %v454, %v453
        %v462 = vpack.c.b16 %v456, %v455
        %v463 = vpack.c.b16 %v458, %v457
        %v464 = vpack.c.b16 %v460, %v459
        %vm469 = vcmask 523264
        %v471 = vsel %vm469, %v437, 0
        %v474 = vsel %vm469, %v438, 0
        %v477 = vsel %vm469, %v439, 0
        %v480 = vsel %vm469, %v440, 0
        %v483 = vsel %vm469, %v441, 0
        %v486 = vsel %vm469, %v442, 0
        %v489 = vsel %vm469, %v443, 0
        %v492 = vsel %vm469, %v444, 0
        %494 = vmatprep.subr.bf16.mxu0 0
        %495 = vmatpush1.bf16.msra.mxu0 0
        %496 = vmatprep.subr.bf16.mxu0 0
        %497 = vmatpush1.bf16.msra.mxu0 0
        %498 = vmatprep.subr.bf16.mxu0 0
        %499 = vmatpush1.bf16.msra.mxu0 0
        %500 = vmatprep.subr.bf16.mxu0 0
        %501 = vmatpush1.bf16.msra.mxu0 0
        %502 = vmatprep.subr.bf16.mxu0 0
        %503 = vmatpush1.bf16.msra.mxu0 %v464
        %504 = vmatprep.subr.bf16.mxu0 0
        %505 = vmatpush1.bf16.msra.mxu0 %v463
        %506 = vmatprep.subr.bf16.mxu0 0
        %507 = vmatpush1.bf16.msra.mxu0 %v462
        %508 = vmatprep.subr.bf16.mxu0 0
        %509 = vmatpush1.bf16.msra.mxu0 %v461
        %510 = vmatprep.subr.bf16.mxu0 0
        %511 = vmatpush2.bf16.msra.mxu0 0
        %512 = vmatprep.subr.bf16.mxu0 0
        %513 = vmatpush2.bf16.msra.mxu0 0
        %514 = vmatprep.subr.bf16.mxu0 0
        %515 = vmatpush2.bf16.msra.mxu0 0
        %516 = vmatprep.subr.bf16.mxu0 0
        %517 = vmatpush2.bf16.msra.mxu0 0
        %518 = vmatprep.subr.bf16.mxu0 0
        %519 = vmatpush2.bf16.msra.mxu0 0
        %520 = vmatprep.subr.bf16.mxu0 0
        %521 = vmatpush2.bf16.msra.mxu0 0
        %522 = vmatprep.subr.bf16.mxu0 0
        %523 = vmatpush2.bf16.msra.mxu0 0
        %524 = vmatprep.subr.bf16.mxu0 0
        %525 = vmatpush2.bf16.msra.mxu0 0
        %526 = vmatprep.mubr.bf16.mxu0 0
        %527 = vmatmul.mubr.bf16.gmra.mxu0 %v471
        %v528 = vpop.f32.mrf.mxu0
        %v529 = vadd.f32 0.0, %v528
        %v530 = vpop.f32.mrf.mxu0
        %v531 = vpop.f32.mrf.mxu0
        %v532 = vadd.f32 0.0, %v531
        %v533 = vpop.f32.mrf.mxu0
        %534 = vmatprep.mubr.bf16.mxu0 0
        %535 = vmatmul.mubr.bf16.gmra.mxu0 %v474
        %v536 = vpop.f32.mrf.mxu0
        %v537 = vadd.f32 0.0, %v536
        %v538 = vpop.f32.mrf.mxu0
        %v539 = vpop.f32.mrf.mxu0
        %v540 = vadd.f32 0.0, %v539
        %v541 = vpop.f32.mrf.mxu0
        %542 = vmatprep.mubr.bf16.mxu0 0
        %543 = vmatmul.mubr.bf16.gmra.mxu0 %v477
        %v544 = vpop.f32.mrf.mxu0
        %v545 = vadd.f32 0.0, %v544
        %v546 = vpop.f32.mrf.mxu0
        %v547 = vpop.f32.mrf.mxu0
        %v548 = vadd.f32 0.0, %v547
        %v549 = vpop.f32.mrf.mxu0
        %550 = vmatprep.mubr.bf16.mxu0 0
        %551 = vmatmul.mubr.bf16.gmra.mxu0 %v480
        %v552 = vpop.f32.mrf.mxu0
        %v553 = vadd.f32 0.0, %v552
        %v554 = vpop.f32.mrf.mxu0
        %v555 = vpop.f32.mrf.mxu0
        %v556 = vadd.f32 0.0, %v555
        %v557 = vpop.f32.mrf.mxu0
        %558 = vmatprep.mubr.bf16.mxu0 0
        %559 = vmatmul.mubr.bf16.gmra.mxu0 %v483
        %v560 = vpop.f32.mrf.mxu0
        %v561 = vadd.f32 0.0, %v560
        %v562 = vpop.f32.mrf.mxu0
        %v563 = vpop.f32.mrf.mxu0
        %v564 = vadd.f32 0.0, %v563
        %v565 = vpop.f32.mrf.mxu0
        %566 = vmatprep.mubr.bf16.mxu0 0
        %567 = vmatmul.mubr.bf16.gmra.mxu0 %v486
        %v568 = vpop.f32.mrf.mxu0
        %v569 = vadd.f32 0.0, %v568
        %v570 = vpop.f32.mrf.mxu0
        %v571 = vpop.f32.mrf.mxu0
        %v572 = vadd.f32 0.0, %v571
        %v573 = vpop.f32.mrf.mxu0
        %574 = vmatprep.mubr.bf16.mxu0 0
        %575 = vmatmul.mubr.bf16.gmra.mxu0 %v489
        %v576 = vpop.f32.mrf.mxu0
        %v577 = vadd.f32 0.0, %v576
        %v578 = vpop.f32.mrf.mxu0
        %v579 = vpop.f32.mrf.mxu0
        %v580 = vadd.f32 0.0, %v579
        %v581 = vpop.f32.mrf.mxu0
        %582 = vmatprep.mubr.bf16.mxu0 0
        %583 = vmatmul.mubr.bf16.gmra.mxu0 %v492
        %v584 = vpop.f32.mrf.mxu0
        %v585 = vadd.f32 0.0, %v584
        %v586 = vpop.f32.mrf.mxu0
        %v587 = vpop.f32.mrf.mxu0
        %v588 = vadd.f32 0.0, %v587
        %v589 = vpop.f32.mrf.mxu0
        %590 = vdwg.mxu0
        %v591 = vadd.f32 %v529, %v532
        %v592 = vadd.f32 %v591, %v537
        %v593 = vadd.f32 %v592, %v540
        %v594 = vadd.f32 %v593, %v545
        %v595 = vadd.f32 %v594, %v548
        %v596 = vadd.f32 %v595, %v553
        %v597 = vadd.f32 %v596, %v556
        %v598 = vadd.f32 %v597, %v561
        %v599 = vadd.f32 %v598, %v564
        %v600 = vadd.f32 %v599, %v569
        %v601 = vadd.f32 %v600, %v572
        %v602 = vadd.f32 %v601, %v577
        %v603 = vadd.f32 %v602, %v580
        %v604 = vadd.f32 %v603, %v585
        %v605 = vadd.f32 %v604, %v588
        %v606 = vrot.slane %v605, 4
        %v607 = vadd.f32 %v605, %v606
        %v608 = vrot.slane %v607, 2
        %v609 = vadd.f32 %v607, %v608
        %v610 = vrot.slane %v609, 1
        %v611 = vadd.f32 %v609, %v610
        %v612 = vmul.f32 %v611, 0.0078125
        %v613 = vmul.f32 %v529, %v529
        %v614 = vmul.f32 %v532, %v532
        %v615 = vmul.f32 %v537, %v537
        %v616 = vmul.f32 %v540, %v540
        %v617 = vmul.f32 %v545, %v545
        %v618 = vmul.f32 %v548, %v548
        %v619 = vmul.f32 %v553, %v553
        %v620 = vmul.f32 %v556, %v556
        %v621 = vmul.f32 %v561, %v561
        %v622 = vmul.f32 %v564, %v564
        %v623 = vmul.f32 %v569, %v569
        %v624 = vmul.f32 %v572, %v572
        %v625 = vmul.f32 %v577, %v577
        %v626 = vmul.f32 %v580, %v580
        %v627 = vmul.f32 %v585, %v585
        %v628 = vmul.f32 %v588, %v588
        %v629 = vadd.f32 %v613, %v614
        %v630 = vadd.f32 %v629, %v615
        %v631 = vadd.f32 %v630, %v616
        %v632 = vadd.f32 %v631, %v617
        %v633 = vadd.f32 %v632, %v618
        %v634 = vadd.f32 %v633, %v619
        %v635 = vadd.f32 %v634, %v620
        %v636 = vadd.f32 %v635, %v621
        %v637 = vadd.f32 %v636, %v622
        %v638 = vadd.f32 %v637, %v623
        %v639 = vadd.f32 %v638, %v624
        %v640 = vadd.f32 %v639, %v625
        %v641 = vadd.f32 %v640, %v626
        %v642 = vadd.f32 %v641, %v627
        %v643 = vadd.f32 %v642, %v628
        %v644 = vrot.slane %v643, 4
        %v645 = vadd.f32 %v643, %v644
        %v646 = vrot.slane %v645, 2
        %v647 = vadd.f32 %v645, %v646
        %v648 = vrot.slane %v647, 1
        %v649 = vadd.f32 %v647, %v648
        %v650 = vmul.f32 %v649, 0.0078125
        %v651 = vmul.f32 %v612, %v612
        %v652 = vsub.f32 %v650, %v651
        %v653 = vmax.f32 %v652, 0.0
        %v654 = vsub.f32 %v529, %v612
        %v655 = vsub.f32 %v532, %v612
        %v656 = vsub.f32 %v537, %v612
        %v657 = vsub.f32 %v540, %v612
        %v658 = vsub.f32 %v545, %v612
        %v659 = vsub.f32 %v548, %v612
        %v660 = vsub.f32 %v553, %v612
        %v661 = vsub.f32 %v556, %v612
        %v662 = vsub.f32 %v561, %v612
        %v663 = vsub.f32 %v564, %v612
        %v664 = vsub.f32 %v569, %v612
        %v665 = vsub.f32 %v572, %v612
        %v666 = vsub.f32 %v577, %v612
        %v667 = vsub.f32 %v580, %v612
        %v668 = vsub.f32 %v585, %v612
        %v669 = vsub.f32 %v588, %v612
        %v670 = vadd.f32 %v653, 1e-05
        %v671 = vrsqrt.pop %v670
        %v672 = vmul.f32 %v654, %v671
        %v673 = vmul.f32 %v655, %v671
        %v674 = vmul.f32 %v656, %v671
        %v675 = vmul.f32 %v657, %v671
        %v676 = vmul.f32 %v658, %v671
        %v677 = vmul.f32 %v659, %v671
        %v678 = vmul.f32 %v660, %v671
        %v679 = vmul.f32 %v661, %v671
        %v680 = vmul.f32 %v662, %v671
        %v681 = vmul.f32 %v663, %v671
        %v682 = vmul.f32 %v664, %v671
        %v683 = vmul.f32 %v665, %v671
        %v684 = vmul.f32 %v666, %v671
        %v685 = vmul.f32 %v667, %v671
        %v686 = vmul.f32 %v668, %v671
        %v687 = vmul.f32 %v669, %v671
        %v688 = vld [vmem:[%s350] sm:$0x1]
        %v690 = vlaneseq
        %v691 = vshrl.u32 %v690, 7
        %v692 = vsub.s32 0, %v691
        %v693 = vrot.slane %v688, %v692
        %v695 = vmul.f32 %v672, %v693
        %v696 = vmul.f32 %v673, %v693
        %v697 = vmul.f32 %v674, %v693
        %v698 = vmul.f32 %v675, %v693
        %v699 = vmul.f32 %v676, %v693
        %v700 = vmul.f32 %v677, %v693
        %v701 = vmul.f32 %v678, %v693
        %v702 = vmul.f32 %v679, %v693
        %v703 = vmul.f32 %v680, %v693
        %v704 = vmul.f32 %v681, %v693
        %v705 = vmul.f32 %v682, %v693
        %v706 = vmul.f32 %v683, %v693
        %v707 = vmul.f32 %v684, %v693
        %v708 = vmul.f32 %v685, %v693
        %v709 = vmul.f32 %v686, %v693
        %v710 = vmul.f32 %v687, %v693
        %v711 = vld [vmem:[%s353] sm:$0x1]
        %v713 = vlaneseq
        %v714 = vshrl.u32 %v713, 7
        %v715 = vsub.s32 0, %v714
        %v716 = vrot.slane %v711, %v715
        %v718 = vadd.f32 %v695, %v716
        %v719 = vadd.f32 %v696, %v716
        %v720 = vadd.f32 %v697, %v716
        %v721 = vadd.f32 %v698, %v716
        %v722 = vadd.f32 %v699, %v716
        %v723 = vadd.f32 %v700, %v716
        %v724 = vadd.f32 %v701, %v716
        %v725 = vadd.f32 %v702, %v716
        %v726 = vadd.f32 %v703, %v716
        %v727 = vadd.f32 %v704, %v716
        %v728 = vadd.f32 %v705, %v716
        %v729 = vadd.f32 %v706, %v716
        %v730 = vadd.f32 %v707, %v716
        %v731 = vadd.f32 %v708, %v716
        %v732 = vadd.f32 %v709, %v716
        %v733 = vadd.f32 %v710, %v716
        %s734 = sld [smem:[#allocation4]]
        %s735 = smul.u32 %s19, 128
        %v736 = vlaneseq
        %v737 = vshrl.u32 %v736, 7
        %v738 = vadd.s32 %v737, 8
        %v739 = vadd.s32 %v737, 16
        %v740 = vadd.s32 %v737, 24
        %v741 = vadd.s32 %v737, 32
        %v742 = vadd.s32 %v737, 40
        %v743 = vadd.s32 %v737, 48
        %v744 = vadd.s32 %v737, 56
        %v745 = vadd.s32 %v737, 64
        %v746 = vadd.s32 %v737, 72
        %v747 = vadd.s32 %v737, 80
        %v748 = vadd.s32 %v737, 88
        %v749 = vadd.s32 %v737, 96
        %v750 = vadd.s32 %v737, 104
        %v751 = vadd.s32 %v737, 112
        %v752 = vadd.s32 %v737, 120
        %v753 = vlaneseq
        %v754 = vand.u32 %v753, 127
        %v755 = vstv %s735
        %v756 = vadd.s32 %v754, %v755
        %v757 = vmul.u32 %v737, 2654435769
        %v758 = vmul.u32 %v738, 2654435769
        %v759 = vmul.u32 %v739, 2654435769
        %v760 = vmul.u32 %v740, 2654435769
        %v761 = vmul.u32 %v741, 2654435769
        %v762 = vmul.u32 %v742, 2654435769
        %v763 = vmul.u32 %v743, 2654435769
        %v764 = vmul.u32 %v744, 2654435769
        %v765 = vmul.u32 %v745, 2654435769
        %v766 = vmul.u32 %v746, 2654435769
        %v767 = vmul.u32 %v747, 2654435769
        %v768 = vmul.u32 %v748, 2654435769
        %v769 = vmul.u32 %v749, 2654435769
        %v770 = vmul.u32 %v750, 2654435769
        %v771 = vmul.u32 %v751, 2654435769
        %v772 = vmul.u32 %v752, 2654435769
        %v773 = vstv %s734
        %v774 = vadd.s32 %v773, %v757
        %v775 = vadd.s32 %v773, %v758
        %v776 = vadd.s32 %v773, %v759
        %v777 = vadd.s32 %v773, %v760
        %v778 = vadd.s32 %v773, %v761
        %v779 = vadd.s32 %v773, %v762
        %v780 = vadd.s32 %v773, %v763
        %v781 = vadd.s32 %v773, %v764
        %v782 = vadd.s32 %v773, %v765
        %v783 = vadd.s32 %v773, %v766
        %v784 = vadd.s32 %v773, %v767
        %v785 = vadd.s32 %v773, %v768
        %v786 = vadd.s32 %v773, %v769
        %v787 = vadd.s32 %v773, %v770
        %v788 = vadd.s32 %v773, %v771
        %v789 = vadd.s32 %v773, %v772
        %v790 = vmul.u32 %v756, 2246822507
        %v791 = vadd.s32 %v774, %v790
        %v792 = vadd.s32 %v775, %v790
        %v793 = vadd.s32 %v776, %v790
        %v794 = vadd.s32 %v777, %v790
        %v795 = vadd.s32 %v778, %v790
        %v796 = vadd.s32 %v779, %v790
        %v797 = vadd.s32 %v780, %v790
        %v798 = vadd.s32 %v781, %v790
        %v799 = vadd.s32 %v782, %v790
        %v800 = vadd.s32 %v783, %v790
        %v801 = vadd.s32 %v784, %v790
        %v802 = vadd.s32 %v785, %v790
        %v803 = vadd.s32 %v786, %v790
        %v804 = vadd.s32 %v787, %v790
        %v805 = vadd.s32 %v788, %v790
        %v806 = vadd.s32 %v789, %v790
        %v807 = vshrl.u32 %v791, 15
        %v808 = vshrl.u32 %v792, 15
        %v809 = vshrl.u32 %v793, 15
        %v810 = vshrl.u32 %v794, 15
        %v811 = vshrl.u32 %v795, 15
        %v812 = vshrl.u32 %v796, 15
        %v813 = vshrl.u32 %v797, 15
        %v814 = vshrl.u32 %v798, 15
        %v815 = vshrl.u32 %v799, 15
        %v816 = vshrl.u32 %v800, 15
        %v817 = vshrl.u32 %v801, 15
        %v818 = vshrl.u32 %v802, 15
        %v819 = vshrl.u32 %v803, 15
        %v820 = vshrl.u32 %v804, 15
        %v821 = vshrl.u32 %v805, 15
        %v822 = vshrl.u32 %v806, 15
        %v823 = vxor.u32 %v807, %v791
        %v824 = vxor.u32 %v808, %v792
        %v825 = vxor.u32 %v809, %v793
        %v826 = vxor.u32 %v810, %v794
        %v827 = vxor.u32 %v811, %v795
        %v828 = vxor.u32 %v812, %v796
        %v829 = vxor.u32 %v813, %v797
        %v830 = vxor.u32 %v814, %v798
        %v831 = vxor.u32 %v815, %v799
        %v832 = vxor.u32 %v816, %v800
        %v833 = vxor.u32 %v817, %v801
        %v834 = vxor.u32 %v818, %v802
        %v835 = vxor.u32 %v819, %v803
        %v836 = vxor.u32 %v820, %v804
        %v837 = vxor.u32 %v821, %v805
        %v838 = vxor.u32 %v822, %v806
        %v839 = vmul.u32 %v823, 739982445
        %v840 = vmul.u32 %v824, 739982445
        %v841 = vmul.u32 %v825, 739982445
        %v842 = vmul.u32 %v826, 739982445
        %v843 = vmul.u32 %v827, 739982445
        %v844 = vmul.u32 %v828, 739982445
        %v845 = vmul.u32 %v829, 739982445
        %v846 = vmul.u32 %v830, 739982445
        %v847 = vmul.u32 %v831, 739982445
        %v848 = vmul.u32 %v832, 739982445
        %v849 = vmul.u32 %v833, 739982445
        %v850 = vmul.u32 %v834, 739982445
        %v851 = vmul.u32 %v835, 739982445
        %v852 = vmul.u32 %v836, 739982445
        %v853 = vmul.u32 %v837, 739982445
        %v854 = vmul.u32 %v838, 739982445
        %v855 = vshrl.u32 %v839, 12
        %v856 = vshrl.u32 %v840, 12
        %v857 = vshrl.u32 %v841, 12
        %v858 = vshrl.u32 %v842, 12
        %v859 = vshrl.u32 %v843, 12
        %v860 = vshrl.u32 %v844, 12
        %v861 = vshrl.u32 %v845, 12
        %v862 = vshrl.u32 %v846, 12
        %v863 = vshrl.u32 %v847, 12
        %v864 = vshrl.u32 %v848, 12
        %v865 = vshrl.u32 %v849, 12
        %v866 = vshrl.u32 %v850, 12
        %v867 = vshrl.u32 %v851, 12
        %v868 = vshrl.u32 %v852, 12
        %v869 = vshrl.u32 %v853, 12
        %v870 = vshrl.u32 %v854, 12
        %v871 = vxor.u32 %v855, %v839
        %v872 = vxor.u32 %v856, %v840
        %v873 = vxor.u32 %v857, %v841
        %v874 = vxor.u32 %v858, %v842
        %v875 = vxor.u32 %v859, %v843
        %v876 = vxor.u32 %v860, %v844
        %v877 = vxor.u32 %v861, %v845
        %v878 = vxor.u32 %v862, %v846
        %v879 = vxor.u32 %v863, %v847
        %v880 = vxor.u32 %v864, %v848
        %v881 = vxor.u32 %v865, %v849
        %v882 = vxor.u32 %v866, %v850
        %v883 = vxor.u32 %v867, %v851
        %v884 = vxor.u32 %v868, %v852
        %v885 = vxor.u32 %v869, %v853
        %v886 = vxor.u32 %v870, %v854
        %v887 = vmul.u32 %v871, 695872825
        %v888 = vmul.u32 %v872, 695872825
        %v889 = vmul.u32 %v873, 695872825
        %v890 = vmul.u32 %v874, 695872825
        %v891 = vmul.u32 %v875, 695872825
        %v892 = vmul.u32 %v876, 695872825
        %v893 = vmul.u32 %v877, 695872825
        %v894 = vmul.u32 %v878, 695872825
        %v895 = vmul.u32 %v879, 695872825
        %v896 = vmul.u32 %v880, 695872825
        %v897 = vmul.u32 %v881, 695872825
        %v898 = vmul.u32 %v882, 695872825
        %v899 = vmul.u32 %v883, 695872825
        %v900 = vmul.u32 %v884, 695872825
        %v901 = vmul.u32 %v885, 695872825
        %v902 = vmul.u32 %v886, 695872825
        %v903 = vshrl.u32 %v887, 15
        %v904 = vshrl.u32 %v888, 15
        %v905 = vshrl.u32 %v889, 15
        %v906 = vshrl.u32 %v890, 15
        %v907 = vshrl.u32 %v891, 15
        %v908 = vshrl.u32 %v892, 15
        %v909 = vshrl.u32 %v893, 15
        %v910 = vshrl.u32 %v894, 15
        %v911 = vshrl.u32 %v895, 15
        %v912 = vshrl.u32 %v896, 15
        %v913 = vshrl.u32 %v897, 15
        %v914 = vshrl.u32 %v898, 15
        %v915 = vshrl.u32 %v899, 15
        %v916 = vshrl.u32 %v900, 15
        %v917 = vshrl.u32 %v901, 15
        %v918 = vshrl.u32 %v902, 15
        %v919 = vxor.u32 %v903, %v887
        %v920 = vxor.u32 %v904, %v888
        %v921 = vxor.u32 %v905, %v889
        %v922 = vxor.u32 %v906, %v890
        %v923 = vxor.u32 %v907, %v891
        %v924 = vxor.u32 %v908, %v892
        %v925 = vxor.u32 %v909, %v893
        %v926 = vxor.u32 %v910, %v894
        %v927 = vxor.u32 %v911, %v895
        %v928 = vxor.u32 %v912, %v896
        %v929 = vxor.u32 %v913, %v897
        %v930 = vxor.u32 %v914, %v898
        %v931 = vxor.u32 %v915, %v899
        %v932 = vxor.u32 %v916, %v900
        %v933 = vxor.u32 %v917, %v901
        %v934 = vxor.u32 %v918, %v902
        %v935 = vshrl.u32 %v919, 31
        %v936 = vshrl.u32 %v920, 31
        %v937 = vshrl.u32 %v921, 31
        %v938 = vshrl.u32 %v922, 31
        %v939 = vshrl.u32 %v923, 31
        %v940 = vshrl.u32 %v924, 31
        %v941 = vshrl.u32 %v925, 31
        %v942 = vshrl.u32 %v926, 31
        %v943 = vshrl.u32 %v927, 31
        %v944 = vshrl.u32 %v928, 31
        %v945 = vshrl.u32 %v929, 31
        %v946 = vshrl.u32 %v930, 31
        %v947 = vshrl.u32 %v931, 31
        %v948 = vshrl.u32 %v932, 31
        %v949 = vshrl.u32 %v933, 31
        %v950 = vshrl.u32 %v934, 31
        %vm951 = vcmp.eq.s32.totalorder %v935, 0
        %vm952 = vcmp.eq.s32.totalorder %v936, 0
        %vm953 = vcmp.eq.s32.totalorder %v937, 0
        %vm954 = vcmp.eq.s32.totalorder %v938, 0
        %vm955 = vcmp.eq.s32.totalorder %v939, 0
        %vm956 = vcmp.eq.s32.totalorder %v940, 0
        %vm957 = vcmp.eq.s32.totalorder %v941, 0
        %vm958 = vcmp.eq.s32.totalorder %v942, 0
        %vm959 = vcmp.eq.s32.totalorder %v943, 0
        %vm960 = vcmp.eq.s32.totalorder %v944, 0
        %vm961 = vcmp.eq.s32.totalorder %v945, 0
        %vm962 = vcmp.eq.s32.totalorder %v946, 0
        %vm963 = vcmp.eq.s32.totalorder %v947, 0
        %vm964 = vcmp.eq.s32.totalorder %v948, 0
        %vm965 = vcmp.eq.s32.totalorder %v949, 0
        %vm966 = vcmp.eq.s32.totalorder %v950, 0
        %vm967 = vcmp.gt.f32.partialorder %v718, 0.0
        %vm968 = vcmp.gt.f32.partialorder %v719, 0.0
        %vm969 = vcmp.gt.f32.partialorder %v720, 0.0
        %vm970 = vcmp.gt.f32.partialorder %v721, 0.0
        %vm971 = vcmp.gt.f32.partialorder %v722, 0.0
        %vm972 = vcmp.gt.f32.partialorder %v723, 0.0
        %vm973 = vcmp.gt.f32.partialorder %v724, 0.0
        %vm974 = vcmp.gt.f32.partialorder %v725, 0.0
        %vm975 = vcmp.gt.f32.partialorder %v726, 0.0
        %vm976 = vcmp.gt.f32.partialorder %v727, 0.0
        %vm977 = vcmp.gt.f32.partialorder %v728, 0.0
        %vm978 = vcmp.gt.f32.partialorder %v729, 0.0
        %vm979 = vcmp.gt.f32.partialorder %v730, 0.0
        %vm980 = vcmp.gt.f32.partialorder %v731, 0.0
        %vm981 = vcmp.gt.f32.partialorder %v732, 0.0
        %vm982 = vcmp.gt.f32.partialorder %v733, 0.0
        %v983 = vmul.f32 %v718, 0.1
        %v984 = vmul.f32 %v719, 0.1
        %v985 = vmul.f32 %v720, 0.1
        %v986 = vmul.f32 %v721, 0.1
        %v987 = vmul.f32 %v722, 0.1
        %v988 = vmul.f32 %v723, 0.1
        %v989 = vmul.f32 %v724, 0.1
        %v990 = vmul.f32 %v725, 0.1
        %v991 = vmul.f32 %v726, 0.1
        %v992 = vmul.f32 %v727, 0.1
        %v993 = vmul.f32 %v728, 0.1
        %v994 = vmul.f32 %v729, 0.1
        %v995 = vmul.f32 %v730, 0.1
        %v996 = vmul.f32 %v731, 0.1
        %v997 = vmul.f32 %v732, 0.1
        %v998 = vmul.f32 %v733, 0.1
        %v999 = vsel %vm967, %v718, %v983
        %v1000 = vsel %vm968, %v719, %v984
        %v1001 = vsel %vm969, %v720, %v985
        %v1002 = vsel %vm970, %v721, %v986
        %v1003 = vsel %vm971, %v722, %v987
        %v1004 = vsel %vm972, %v723, %v988
        %v1005 = vsel %vm973, %v724, %v989
        %v1006 = vsel %vm974, %v725, %v990
        %v1007 = vsel %vm975, %v726, %v991
        %v1008 = vsel %vm976, %v727, %v992
        %v1009 = vsel %vm977, %v728, %v993
        %v1010 = vsel %vm978, %v729, %v994
        %v1011 = vsel %vm979, %v730, %v995
        %v1012 = vsel %vm980, %v731, %v996
        %v1013 = vsel %vm981, %v732, %v997
        %v1014 = vsel %vm982, %v733, %v998
        %v1015 = vmul.f32 %v999, 2.0
        %v1016 = vmul.f32 %v1000, 2.0
        %v1017 = vmul.f32 %v1001, 2.0
        %v1018 = vmul.f32 %v1002, 2.0
        %v1019 = vmul.f32 %v1003, 2.0
        %v1020 = vmul.f32 %v1004, 2.0
        %v1021 = vmul.f32 %v1005, 2.0
        %v1022 = vmul.f32 %v1006, 2.0
        %v1023 = vmul.f32 %v1007, 2.0
        %v1024 = vmul.f32 %v1008, 2.0
        %v1025 = vmul.f32 %v1009, 2.0
        %v1026 = vmul.f32 %v1010, 2.0
        %v1027 = vmul.f32 %v1011, 2.0
        %v1028 = vmul.f32 %v1012, 2.0
        %v1029 = vmul.f32 %v1013, 2.0
        %v1030 = vmul.f32 %v1014, 2.0
        %v1031 = vsel %vm951, %v1015, 0.0
        %v1032 = vsel %vm952, %v1016, 0.0
        %v1033 = vsel %vm953, %v1017, 0.0
        %v1034 = vsel %vm954, %v1018, 0.0
        %v1035 = vsel %vm955, %v1019, 0.0
        %v1036 = vsel %vm956, %v1020, 0.0
        %v1037 = vsel %vm957, %v1021, 0.0
        %v1038 = vsel %vm958, %v1022, 0.0
        %v1039 = vsel %vm959, %v1023, 0.0
        %v1040 = vsel %vm960, %v1024, 0.0
        %v1041 = vsel %vm961, %v1025, 0.0
        %v1042 = vsel %vm962, %v1026, 0.0
        %v1043 = vsel %vm963, %v1027, 0.0
        %v1044 = vsel %vm964, %v1028, 0.0
        %v1045 = vsel %vm965, %v1029, 0.0
        %v1046 = vsel %vm966, %v1030, 0.0
        %v1047 = vld [vmem:[#allocation2] sm:$0xff]
        %v1048 = vld [vmem:[#allocation2 + $0x8] sm:$0xff]
        %v1049 = vld [vmem:[#allocation2 + $0x10] sm:$0xff]
        %v1050 = vld [vmem:[#allocation2 + $0x18] sm:$0xff]
        %v1051 = vld [vmem:[#allocation2 + $0x20] sm:$0xff]
        %v1052 = vld [vmem:[#allocation2 + $0x28] sm:$0xff]
        %v1053 = vld [vmem:[#allocation2 + $0x30] sm:$0xff]
        %v1054 = vld [vmem:[#allocation2 + $0x38] sm:$0xff]
        %v1055 = vld [vmem:[#allocation2 + $0x40] sm:$0xff]
        %v1056 = vld [vmem:[#allocation2 + $0x48] sm:$0xff]
        %v1057 = vld [vmem:[#allocation2 + $0x50] sm:$0xff]
        %v1058 = vld [vmem:[#allocation2 + $0x58] sm:$0xff]
        %v1059 = vld [vmem:[#allocation2 + $0x60] sm:$0xff]
        %v1060 = vld [vmem:[#allocation2 + $0x68] sm:$0xff]
        %v1061 = vld [vmem:[#allocation2 + $0x70] sm:$0xff]
        %v1062 = vld [vmem:[#allocation2 + $0x78] sm:$0xff]
        %v1063 = vpack.c.bf16 %v1032, %v1031
        %v1064 = vpack.c.bf16 %v1034, %v1033
        %v1065 = vpack.c.bf16 %v1036, %v1035
        %v1066 = vpack.c.bf16 %v1038, %v1037
        %v1067 = vpack.c.bf16 %v1040, %v1039
        %v1068 = vpack.c.bf16 %v1042, %v1041
        %v1069 = vpack.c.bf16 %v1044, %v1043
        %v1070 = vpack.c.bf16 %v1046, %v1045
        %v1071 = vld [vmem:[%s358] sm:$0xf]
        %v1072 = vld [vmem:[%s358 + $0x4] sm:$0xf]
        %v1073 = vld [vmem:[%s358 + $0x8] sm:$0xf]
        %v1074 = vld [vmem:[%s358 + $0xc] sm:$0xf]
        %v1075 = vld [vmem:[%s358 + $0x10] sm:$0xf]
        %v1076 = vld [vmem:[%s358 + $0x14] sm:$0xf]
        %v1077 = vld [vmem:[%s358 + $0x18] sm:$0xf]
        %v1078 = vld [vmem:[%s358 + $0x1c] sm:$0xf]
        %v1079 = vld [vmem:[%s358 + $0x20] sm:$0xf]
        %v1080 = vld [vmem:[%s358 + $0x24] sm:$0xf]
        %v1081 = vld [vmem:[%s358 + $0x28] sm:$0xf]
        %v1082 = vld [vmem:[%s358 + $0x2c] sm:$0xf]
        %v1083 = vld [vmem:[%s358 + $0x30] sm:$0xf]
        %v1084 = vld [vmem:[%s358 + $0x34] sm:$0xf]
        %v1085 = vld [vmem:[%s358 + $0x38] sm:$0xf]
        %v1086 = vld [vmem:[%s358 + $0x3c] sm:$0xf]
        %v1103 = vunpack.c.l.b16 %v1071
        %v1104 = vunpack.c.l.b16 %v1072
        %v1105 = vunpack.c.l.b16 %v1073
        %v1106 = vunpack.c.l.b16 %v1074
        %v1107 = vunpack.c.l.b16 %v1075
        %v1108 = vunpack.c.l.b16 %v1076
        %v1109 = vunpack.c.l.b16 %v1077
        %v1110 = vunpack.c.l.b16 %v1078
        %v1111 = vunpack.c.l.b16 %v1079
        %v1112 = vunpack.c.l.b16 %v1080
        %v1113 = vunpack.c.l.b16 %v1081
        %v1114 = vunpack.c.l.b16 %v1082
        %v1115 = vunpack.c.l.b16 %v1083
        %v1116 = vunpack.c.l.b16 %v1084
        %v1117 = vunpack.c.l.b16 %v1085
        %v1118 = vunpack.c.l.b16 %v1086
        %v1119 = vpack.c.b16 %v1104, %v1103
        %v1120 = vpack.c.b16 %v1106, %v1105
        %v1121 = vpack.c.b16 %v1108, %v1107
        %v1122 = vpack.c.b16 %v1110, %v1109
        %v1123 = vpack.c.b16 %v1112, %v1111
        %v1124 = vpack.c.b16 %v1114, %v1113
        %v1125 = vpack.c.b16 %v1116, %v1115
        %v1126 = vpack.c.b16 %v1118, %v1117
        %1135 = vmatprep.subr.bf16.mxu0 0
        %1136 = vmatpush1.bf16.msra.mxu0 %v1126
        %1137 = vmatprep.subr.bf16.mxu0 0
        %1138 = vmatpush1.bf16.msra.mxu0 %v1125
        %1139 = vmatprep.subr.bf16.mxu0 0
        %1140 = vmatpush1.bf16.msra.mxu0 %v1124
        %1141 = vmatprep.subr.bf16.mxu0 0
        %1142 = vmatpush1.bf16.msra.mxu0 %v1123
        %1143 = vmatprep.subr.bf16.mxu0 0
        %1144 = vmatpush1.bf16.msra.mxu0 %v1122
        %1145 = vmatprep.subr.bf16.mxu0 0
        %1146 = vmatpush1.bf16.msra.mxu0 %v1121
        %1147 = vmatprep.subr.bf16.mxu0 0
        %1148 = vmatpush1.bf16.msra.mxu0 %v1120
        %1149 = vmatprep.subr.bf16.mxu0 0
        %1150 = vmatpush1.bf16.msra.mxu0 %v1119
        %1151 = vmatprep.subr.bf16.mxu0 0
        %1152 = vmatpush2.bf16.msra.mxu0 0
        %1153 = vmatprep.subr.bf16.mxu0 0
        %1154 = vmatpush2.bf16.msra.mxu0 0
        %1155 = vmatprep.subr.bf16.mxu0 0
        %1156 = vmatpush2.bf16.msra.mxu0 0
        %1157 = vmatprep.subr.bf16.mxu0 0
        %1158 = vmatpush2.bf16.msra.mxu0 0
        %1159 = vmatprep.subr.bf16.mxu0 0
        %1160 = vmatpush2.bf16.msra.mxu0 0
        %1161 = vmatprep.subr.bf16.mxu0 0
        %1162 = vmatpush2.bf16.msra.mxu0 0
        %1163 = vmatprep.subr.bf16.mxu0 0
        %1164 = vmatpush2.bf16.msra.mxu0 0
        %1165 = vmatprep.subr.bf16.mxu0 0
        %1166 = vmatpush2.bf16.msra.mxu0 0
        %1167 = vmatprep.mubr.bf16.mxu0 0
        %1168 = vmatmul.mubr.bf16.gmra.mxu0 %v1063
        %v1169 = vpop.f32.mrf.mxu0
        %v1170 = vadd.f32 0.0, %v1169
        %v1171 = vpop.f32.mrf.mxu0
        %v1172 = vpop.f32.mrf.mxu0
        %v1173 = vadd.f32 0.0, %v1172
        %v1174 = vpop.f32.mrf.mxu0
        %1175 = vmatprep.mubr.bf16.mxu0 0
        %1176 = vmatmul.mubr.bf16.gmra.mxu0 %v1064
        %v1177 = vpop.f32.mrf.mxu0
        %v1178 = vadd.f32 0.0, %v1177
        %v1179 = vpop.f32.mrf.mxu0
        %v1180 = vpop.f32.mrf.mxu0
        %v1181 = vadd.f32 0.0, %v1180
        %v1182 = vpop.f32.mrf.mxu0
        %1183 = vmatprep.mubr.bf16.mxu0 0
        %1184 = vmatmul.mubr.bf16.gmra.mxu0 %v1065
        %v1185 = vpop.f32.mrf.mxu0
        %v1186 = vadd.f32 0.0, %v1185
        %v1187 = vpop.f32.mrf.mxu0
        %v1188 = vpop.f32.mrf.mxu0
        %v1189 = vadd.f32 0.0, %v1188
        %v1190 = vpop.f32.mrf.mxu0
        %1191 = vmatprep.mubr.bf16.mxu0 0
        %1192 = vmatmul.mubr.bf16.gmra.mxu0 %v1066
        %v1193 = vpop.f32.mrf.mxu0
        %v1194 = vadd.f32 0.0, %v1193
        %v1195 = vpop.f32.mrf.mxu0
        %v1196 = vpop.f32.mrf.mxu0
        %v1197 = vadd.f32 0.0, %v1196
        %v1198 = vpop.f32.mrf.mxu0
        %1199 = vmatprep.mubr.bf16.mxu0 0
        %1200 = vmatmul.mubr.bf16.gmra.mxu0 %v1067
        %v1201 = vpop.f32.mrf.mxu0
        %v1202 = vadd.f32 0.0, %v1201
        %v1203 = vpop.f32.mrf.mxu0
        %v1204 = vpop.f32.mrf.mxu0
        %v1205 = vadd.f32 0.0, %v1204
        %v1206 = vpop.f32.mrf.mxu0
        %1207 = vmatprep.mubr.bf16.mxu0 0
        %1208 = vmatmul.mubr.bf16.gmra.mxu0 %v1068
        %v1209 = vpop.f32.mrf.mxu0
        %v1210 = vadd.f32 0.0, %v1209
        %v1211 = vpop.f32.mrf.mxu0
        %v1212 = vpop.f32.mrf.mxu0
        %v1213 = vadd.f32 0.0, %v1212
        %v1214 = vpop.f32.mrf.mxu0
        %1215 = vmatprep.mubr.bf16.mxu0 0
        %1216 = vmatmul.mubr.bf16.gmra.mxu0 %v1069
        %v1217 = vpop.f32.mrf.mxu0
        %v1218 = vadd.f32 0.0, %v1217
        %v1219 = vpop.f32.mrf.mxu0
        %v1220 = vpop.f32.mrf.mxu0
        %v1221 = vadd.f32 0.0, %v1220
        %v1222 = vpop.f32.mrf.mxu0
        %1223 = vmatprep.mubr.bf16.mxu0 0
        %1224 = vmatmul.mubr.bf16.gmra.mxu0 %v1070
        %v1225 = vpop.f32.mrf.mxu0
        %v1226 = vadd.f32 0.0, %v1225
        %v1227 = vpop.f32.mrf.mxu0
        %v1228 = vpop.f32.mrf.mxu0
        %v1229 = vadd.f32 0.0, %v1228
        %v1230 = vpop.f32.mrf.mxu0
        %1231 = vdwg.mxu0
        %v1232 = vadd.f32 %v1047, %v1170
        %v1233 = vadd.f32 %v1048, %v1173
        %v1234 = vadd.f32 %v1049, %v1178
        %v1235 = vadd.f32 %v1050, %v1181
        %v1236 = vadd.f32 %v1051, %v1186
        %v1237 = vadd.f32 %v1052, %v1189
        %v1238 = vadd.f32 %v1053, %v1194
        %v1239 = vadd.f32 %v1054, %v1197
        %v1240 = vadd.f32 %v1055, %v1202
        %v1241 = vadd.f32 %v1056, %v1205
        %v1242 = vadd.f32 %v1057, %v1210
        %v1243 = vadd.f32 %v1058, %v1213
        %v1244 = vadd.f32 %v1059, %v1218
        %v1245 = vadd.f32 %v1060, %v1221
        %v1246 = vadd.f32 %v1061, %v1226
        %v1247 = vadd.f32 %v1062, %v1229
        %1248 = vst [vmem:[#allocation2] sm:$0xff] %v1232
        %1249 = vst [vmem:[#allocation2 + $0x8] sm:$0xff] %v1233
        %1250 = vst [vmem:[#allocation2 + $0x10] sm:$0xff] %v1234
        %1251 = vst [vmem:[#allocation2 + $0x18] sm:$0xff] %v1235
        %1252 = vst [vmem:[#allocation2 + $0x20] sm:$0xff] %v1236
        %1253 = vst [vmem:[#allocation2 + $0x28] sm:$0xff] %v1237
        %1254 = vst [vmem:[#allocation2 + $0x30] sm:$0xff] %v1238
        %1255 = vst [vmem:[#allocation2 + $0x38] sm:$0xff] %v1239
        %1256 = vst [vmem:[#allocation2 + $0x40] sm:$0xff] %v1240
        %1257 = vst [vmem:[#allocation2 + $0x48] sm:$0xff] %v1241
        %1258 = vst [vmem:[#allocation2 + $0x50] sm:$0xff] %v1242
        %1259 = vst [vmem:[#allocation2 + $0x58] sm:$0xff] %v1243
        %1260 = vst [vmem:[#allocation2 + $0x60] sm:$0xff] %v1244
        %1261 = vst [vmem:[#allocation2 + $0x68] sm:$0xff] %v1245
        %1262 = vst [vmem:[#allocation2 + $0x70] sm:$0xff] %v1246
        %1263 = vst [vmem:[#allocation2 + $0x78] sm:$0xff] %v1247
        %p1264 = scmp.eq.s32.totalorder %s19, 3
        // Predicated region
        $region90: #{fcblock_forward.1} parent=80 // pred_check
          %p1265 = pneg %p1264
        $region91: #{fcblock_forward.1} parent=80 // pred_check_branch
          %1267 = sbr.rel (%p1265) target = $region93
        $region92: #{fcblock_forward.1} parent=80 // pred_region
          %v1268 = vld [vmem:[#allocation2] sm:$0xff]
          %v1269 = vld [vmem:[#allocation2 + $0x8] sm:$0xff]
          %v1270 = vld [vmem:[#allocation2 + $0x10] sm:$0xff]
          %v1271 = vld [vmem:[#allocation2 + $0x18] sm:$0xff]
          %v1272 = vld [vmem:[#allocation2 + $0x20] sm:$0xff]
          %v1273 = vld [vmem:[#allocation2 + $0x28] sm:$0xff]
          %v1274 = vld [vmem:[#allocation2 + $0x30] sm:$0xff]
          %v1275 = vld [vmem:[#allocation2 + $0x38] sm:$0xff]
          %v1276 = vld [vmem:[#allocation2 + $0x40] sm:$0xff]
          %v1277 = vld [vmem:[#allocation2 + $0x48] sm:$0xff]
          %v1278 = vld [vmem:[#allocation2 + $0x50] sm:$0xff]
          %v1279 = vld [vmem:[#allocation2 + $0x58] sm:$0xff]
          %v1280 = vld [vmem:[#allocation2 + $0x60] sm:$0xff]
          %v1281 = vld [vmem:[#allocation2 + $0x68] sm:$0xff]
          %v1282 = vld [vmem:[#allocation2 + $0x70] sm:$0xff]
          %v1283 = vld [vmem:[#allocation2 + $0x78] sm:$0xff]
          %v1284 = vld [vmem:[%s6] sm:$0x1]
          %v1286 = vlaneseq
          %v1287 = vshrl.u32 %v1286, 7
          %v1288 = vsub.s32 0, %v1287
          %v1289 = vrot.slane %v1284, %v1288
          %v1291 = vadd.f32 %v1268, %v1289
          %v1292 = vadd.f32 %v1269, %v1289
          %v1293 = vadd.f32 %v1270, %v1289
          %v1294 = vadd.f32 %v1271, %v1289
          %v1295 = vadd.f32 %v1272, %v1289
          %v1296 = vadd.f32 %v1273, %v1289
          %v1297 = vadd.f32 %v1274, %v1289
          %v1298 = vadd.f32 %v1275, %v1289
          %v1299 = vadd.f32 %v1276, %v1289
          %v1300 = vadd.f32 %v1277, %v1289
          %v1301 = vadd.f32 %v1278, %v1289
          %v1302 = vadd.f32 %v1279, %v1289
          %v1303 = vadd.f32 %v1280, %v1289
          %v1304 = vadd.f32 %v1281, %v1289
          %v1305 = vadd.f32 %v1282, %v1289
          %v1306 = vadd.f32 %v1283, %v1289
          %1307 = vst [vmem:[%s7] sm:$0xff] %v1291
          %1308 = vst [vmem:[%s7 + $0x8] sm:$0xff] %v1292
          %1309 = vst [vmem:[%s7 + $0x10] sm:$0xff] %v1293
          %1310 = vst [vmem:[%s7 + $0x18] sm:$0xff] %v1294
          %1311 = vst [vmem:[%s7 + $0x20] sm:$0xff] %v1295
          %1312 = vst [vmem:[%s7 + $0x28] sm:$0xff] %v1296
          %1313 = vst [vmem:[%s7 + $0x30] sm:$0xff] %v1297
          %1314 = vst [vmem:[%s7 + $0x38] sm:$0xff] %v1298
          %1315 = vst [vmem:[%s7 + $0x40] sm:$0xff] %v1299
          %1316 = vst [vmem:[%s7 + $0x48] sm:$0xff] %v1300
          %1317 = vst [vmem:[%s7 + $0x50] sm:$0xff] %v1301
          %1318 = vst [vmem:[%s7 + $0x58] sm:$0xff] %v1302
          %1319 = vst [vmem:[%s7 + $0x60] sm:$0xff] %v1303
          %1320 = vst [vmem:[%s7 + $0x68] sm:$0xff] %v1304
          %1321 = vst [vmem:[%s7 + $0x70] sm:$0xff] %v1305
          %1322 = vst [vmem:[%s7 + $0x78] sm:$0xff] %v1306
        $region93: #{fcblock_forward.1} parent=80 // pred_fallthru
          _
        // Predicated region
        $region94: #{fcblock_forward.1} parent=80 // pred_check
          %p1323 = pneg %p178
        $region95: #{fcblock_forward.1} parent=80 // pred_check_branch
          %1325 = sbr.rel (%p1323) target = $region97
        $region96: #{fcblock_forward.1} parent=80 // pred_region
          _
        $region97: #{fcblock_forward.1} parent=80 // pred_fallthru
          _
        // Predicated region
        $region98: #{fcblock_forward.1} parent=80 // pred_check
          %p1326 = pneg %p178
        $region99: #{fcblock_forward.1} parent=80 // pred_check_branch
          %1328 = sbr.rel (%p1326) target = $region101
        $region100: #{fcblock_forward.1} parent=80 // pred_region
          _
        $region101: #{fcblock_forward.1} parent=80 // pred_fallthru
          _
      $region81: #{fcblock_forward.1} parent=5 // pred_fallthru
        _
      %p1329 = scmp.le.s32.totalorder 2, %s14
      // Predicated region
      $region102: #{fcblock_forward.1} parent=5 // pred_check
        %p1330 = pneg %p1329
      $region103: #{fcblock_forward.1} parent=5 // pred_check_branch
        %1332 = sbr.rel (%p1330) target = $region105
      $region104: #{fcblock_forward.1} parent=5 // pred_region
        %s1333 = ssub.s32 %s14, 2
      $region105: #{fcblock_forward.1} parent=5 // pred_fallthru
        _
    $region6: #{fcblock_forward.1} parent=1 // loop_footer
      %s18 = sadd.s32 1, %s14
    $region7: #{fcblock_forward.1} parent=1 // loop_footer_branch
      %13 = sbr.rel target = $region3
    $region8: #{fcblock_forward.1} parent=1 // loop_exit
      _

</llo_original>
